<compile_context>
chip_gen: v6e
topology: v6e:2x2x1
jax: 0.10.0
libtpu: 0.0.40
codegen_flags: <defaults>
</compile_context>

<pallas_src>
import functools

import jax
import jax.numpy as jnp
from jax import lax
from jax.experimental import pallas as pl
from jax.experimental.pallas import tpu as pltpu


# -----------------------------------------------------------------------------
# Fused ResidualGroup kernel (one batch element per grid step)
# -----------------------------------------------------------------------------
def _group_kernel(x_ref, w0_ref, b0_ref, w1_ref, b1_ref,
                  cw1_ref, cb1_ref, cw2_ref, cb2_ref,
                  tw_ref, tb_ref, o_ref, *, H, W, n_resblocks):
    """Whole ResidualGroup, channels-first (C, H*W) lane-dense layout."""
    HW = H * W
    C = x_ref.shape[1]
    f32 = jnp.float32
    pad = W + 1  # flat halo: one row + one element on each side

    # Column masks for the horizontal taps, computed once and reused by every
    # conv in the group (kills horizontal wrap-around of the flat shifts).
    col = lax.broadcasted_iota(jnp.int32, (C, HW), 1) % W
    mask_l = (col >= 1).astype(f32)        # tap dx = -1 valid
    mask_r = (col <= W - 2).astype(f32)    # tap dx = +1 valid

    def conv3x3(h, w_mat, b):
        # h: (C, HW) f32, w_mat: (C, 9*C), b: (C, 1).
        # Flat zero padding handles the vertical halo; static lane-offset
        # slices give the 9 shifted taps; one big-K MXU matmul does the conv.
        zpad = jnp.zeros((C, pad), f32)
        hp = jnp.concatenate([zpad, h, zpad], axis=1)       # (C, HW + 2W + 2)
        taps = []
        for dy in (-1, 0, 1):
            for dx in (-1, 0, 1):
                start = pad + dy * W + dx
                patch = hp[:, start:start + HW]             # (C, HW)
                if dx == -1:
                    patch = patch * mask_l
                elif dx == 1:
                    patch = patch * mask_r
                taps.append(patch)
        patches = jnp.concatenate(taps, axis=0)             # (9*C, HW)
        return jnp.dot(w_mat, patches,
                       preferred_element_type=f32) + b      # (C, HW)

    x = x_ref[0].astype(f32)                                # (C, HW)
    inv_hw = 1.0 / float(HW)

    h = x
    for i in range(n_resblocks):                            # static unroll
        skip = h
        # RCAB body: conv -> ReLU -> conv
        t = jnp.maximum(conv3x3(h, w0_ref[i], b0_ref[i]), 0.0)
        t = conv3x3(t, w1_ref[i], b1_ref[i])
        # Channel attention + RCAB skip (fused)
        pooled = jnp.sum(t, axis=1, keepdims=True) * inv_hw             # (C, 1)
        z = jnp.dot(cw1_ref[i], pooled, preferred_element_type=f32)     # (Cr,1)
        z = jnp.maximum(z + cb1_ref[i], 0.0)
        s = jnp.dot(cw2_ref[i], z, preferred_element_type=f32)          # (C, 1)
        s = jax.nn.sigmoid(s + cb2_ref[i])
        h = t * s + skip

    out = conv3x3(h, tw_ref[...], tb_ref[...]) + x          # group skip
    o_ref[0] = out.astype(o_ref.dtype)


# -----------------------------------------------------------------------------
# Wrapper: weight packing + pallas_call plumbing (stays in NCHW end-to-end)
# -----------------------------------------------------------------------------
def _conv_mat(w_hwio):
    """HWIO (3,3,Cin,Cout) -> im2col matrix (Cout, 9*Cin), tap-major."""
    kh, kw, cin, cout = w_hwio.shape
    return jnp.transpose(w_hwio, (3, 0, 1, 2)).reshape(cout, kh * kw * cin)


def residual_group_forward(x_nchw, params):
    N, C, H, W = x_nchw.shape
    HW = H * W
    blocks = params["blocks"]
    nb = len(blocks)
    Cr = blocks[0]["ca_w1"].shape[0]

    # Pack all weights once (tiny): stacked im2col matrices + column biases.
    W0 = jnp.stack([_conv_mat(b["w0"]) for b in blocks])          # (nb, C, 9C)
    B0 = jnp.stack([b["b0"].reshape(C, 1) for b in blocks])       # (nb, C, 1)
    W1 = jnp.stack([_conv_mat(b["w1"]) for b in blocks])
    B1 = jnp.stack([b["b1"].reshape(C, 1) for b in blocks])
    CW1 = jnp.stack([b["ca_w1"] for b in blocks])                 # (nb, Cr, C)
    CB1 = jnp.stack([b["ca_b1"].reshape(Cr, 1) for b in blocks])  # (nb, Cr, 1)
    CW2 = jnp.stack([b["ca_w2"] for b in blocks])                 # (nb, C, Cr)
    CB2 = jnp.stack([b["ca_b2"].reshape(C, 1) for b in blocks])   # (nb, C, 1)
    TW = _conv_mat(params["tail_w"])                              # (C, 9C)
    TB = params["tail_b"].reshape(C, 1)                           # (C, 1)

    # NCHW is already channels-first: flattening the spatial dims is free and
    # gives a lane-dense (C, H*W) layout inside the kernel (no transposes).
    x_flat = x_nchw.reshape(N, C, HW)

    def full(shape):
        return pl.BlockSpec(shape, lambda n: (0,) * len(shape))

    out = pl.pallas_call(
        functools.partial(_group_kernel, H=H, W=W, n_resblocks=nb),
        out_shape=jax.ShapeDtypeStruct((N, C, HW), x_nchw.dtype),
        grid=(N,),
        in_specs=[
            pl.BlockSpec((1, C, HW), lambda n: (n, 0, 0)),
            full((nb, C, 9 * C)), full((nb, C, 1)),
            full((nb, C, 9 * C)), full((nb, C, 1)),
            full((nb, Cr, C)), full((nb, Cr, 1)),
            full((nb, C, Cr)), full((nb, C, 1)),
            full((C, 9 * C)), full((C, 1)),
        ],
        out_specs=pl.BlockSpec((1, C, HW), lambda n: (n, 0, 0)),
        compiler_params=pltpu.CompilerParams(
            dimension_semantics=("parallel",),
            vmem_limit_bytes=32 * 1024 * 1024),
    )(x_flat, W0, B0, W1, B1, CW1, CB1, CW2, CB2, TW, TB)

    return out.reshape(N, C, H, W)


# -----------------------------------------------------------------------------
# Deterministic parameter init (matches PyTorch layer shapes)
# -----------------------------------------------------------------------------
def init_params(key, n_feat, reduction, n_resblocks, ksize=3):
    cr = n_feat // reduction
    blocks = []
    for _ in range(n_resblocks):
        key, *ks = jax.random.split(key, 9)
        blocks.append({
            # conv weights stored HWIO (kh, kw, Cin, Cout)
            "w0": jax.random.normal(ks[0], (ksize, ksize, n_feat, n_feat), jnp.float32) * 0.05,
            "b0": jax.random.normal(ks[1], (n_feat,), jnp.float32) * 0.05,
            "w1": jax.random.normal(ks[2], (ksize, ksize, n_feat, n_feat), jnp.float32) * 0.05,
            "b1": jax.random.normal(ks[3], (n_feat,), jnp.float32) * 0.05,
            # 1x1 conv weights stored like squeezed PyTorch Conv2d: (Cout, Cin)
            "ca_w1": jax.random.normal(ks[4], (cr, n_feat), jnp.float32) * 0.05,
            "ca_b1": jax.random.normal(ks[5], (cr,), jnp.float32) * 0.05,
            "ca_w2": jax.random.normal(ks[6], (n_feat, cr), jnp.float32) * 0.05,
            "ca_b2": jax.random.normal(ks[7], (n_feat,), jnp.float32) * 0.05,
        })
    key, k1, k2 = jax.random.split(key, 3)
    return {
        "blocks": blocks,
        "tail_w": jax.random.normal(k1, (ksize, ksize, n_feat, n_feat), jnp.float32) * 0.05,
        "tail_b": jax.random.normal(k2, (n_feat,), jnp.float32) * 0.05,
    }


# -----------------------------------------------------------------------------
# Pure-JAX reference (for correctness check)
# -----------------------------------------------------------------------------
def _conv_ref(x, w, b):
    return lax.conv_general_dilated(
        x, w, (1, 1), "SAME",
        dimension_numbers=("NHWC", "HWIO", "NHWC")) + b


def _rcab_ref(x, p):
    h = jax.nn.relu(_conv_ref(x, p["w0"], p["b0"]))
    h = _conv_ref(h, p["w1"], p["b1"])
    pooled = jnp.mean(h, axis=(1, 2))                       # (N, C)
    z = jax.nn.relu(pooled @ p["ca_w1"].T + p["ca_b1"])
    s = jax.nn.sigmoid(z @ p["ca_w2"].T + p["ca_b2"])
    return h * s[:, None, None, :] + x


def residual_group_ref(x_nchw, params):
    x = jnp.transpose(x_nchw, (0, 2, 3, 1))
    h = x
    for blk in params["blocks"]:
        h = _rcab_ref(h, blk)
    out = _conv_ref(h, params["tail_w"], params["tail_b"]) + x
    return jnp.transpose(out, (0, 3, 1, 2))


# -----------------------------------------------------------------------------
if __name__ == "__main__":
    # Small config: n_feat=16, reduction=4 (C//r = 4), kernel_size=3,
    # n_resblocks=2, batch=2, spatial 16x16 (NCHW like PyTorch).
    N, C, H, W = 2, 16, 16, 16
    reduction = 4
    n_resblocks = 2

    key = jax.random.PRNGKey(0)
    kx, kp = jax.random.split(key)
    x = jax.random.normal(kx, (N, C, H, W), jnp.float32)
    params = init_params(kp, C, reduction, n_resblocks)

    fwd = jax.jit(residual_group_forward)
    out = jax.block_until_ready(fwd(x, params))
    ref = jax.block_until_ready(residual_group_ref(x, params))

    assert out.shape == x.shape and out.dtype == x.dtype
    assert jnp.allclose(out, ref, rtol=1e-4, atol=1e-4), (
        float(jnp.max(jnp.abs(out - ref))))

    print("KERNEL_OK")
</pallas_src>

<mosaic_0001>
module attributes {stable_mosaic.version = 11 : i64} {
  func.func @_group_kernel(%arg0: i32, %arg1: memref<1x16x256xf32, #tpu.memory_space<vmem>>, %arg2: memref<2x16x144xf32, #tpu.memory_space<vmem>>, %arg3: memref<2x16x1xf32, #tpu.memory_space<vmem>>, %arg4: memref<2x16x144xf32, #tpu.memory_space<vmem>>, %arg5: memref<2x16x1xf32, #tpu.memory_space<vmem>>, %arg6: memref<2x4x16xf32, #tpu.memory_space<vmem>>, %arg7: memref<2x4x1xf32, #tpu.memory_space<vmem>>, %arg8: memref<2x16x4xf32, #tpu.memory_space<vmem>>, %arg9: memref<2x16x1xf32, #tpu.memory_space<vmem>>, %arg10: memref<16x144xf32, #tpu.memory_space<vmem>>, %arg11: memref<16x1xf32, #tpu.memory_space<vmem>>, %arg12: memref<1x16x256xf32, #tpu.memory_space<vmem>>) attributes {dimension_semantics = [#tpu.dimension_semantics<parallel>], iteration_bounds = array<i64: 2>, scalar_prefetch = 0 : i64, scratch_operands = 0 : i64, tpu.core_type = #tpu.core_type<tc>, window_params = [{transform_indices = @transform_0, window_bounds = array<i64: 1, 16, 256>}, {pipeline_mode = #tpu.pipeline_mode<synchronous>, transform_indices = @transform_1, window_bounds = array<i64: 2, 16, 144>}, {pipeline_mode = #tpu.pipeline_mode<synchronous>, transform_indices = @transform_2, window_bounds = array<i64: 2, 16, 1>}, {pipeline_mode = #tpu.pipeline_mode<synchronous>, transform_indices = @transform_3, window_bounds = array<i64: 2, 16, 144>}, {pipeline_mode = #tpu.pipeline_mode<synchronous>, transform_indices = @transform_4, window_bounds = array<i64: 2, 16, 1>}, {pipeline_mode = #tpu.pipeline_mode<synchronous>, transform_indices = @transform_5, window_bounds = array<i64: 2, 4, 16>}, {pipeline_mode = #tpu.pipeline_mode<synchronous>, transform_indices = @transform_6, window_bounds = array<i64: 2, 4, 1>}, {pipeline_mode = #tpu.pipeline_mode<synchronous>, transform_indices = @transform_7, window_bounds = array<i64: 2, 16, 4>}, {pipeline_mode = #tpu.pipeline_mode<synchronous>, transform_indices = @transform_8, window_bounds = array<i64: 2, 16, 1>}, {pipeline_mode = #tpu.pipeline_mode<synchronous>, transform_indices = @transform_9, window_bounds = array<i64: 16, 144>}, {pipeline_mode = #tpu.pipeline_mode<synchronous>, transform_indices = @transform_10, window_bounds = array<i64: 16, 1>}, {transform_indices = @transform_11, window_bounds = array<i64: 1, 16, 256>}]} {
    %0 = tpu.iota {dimensions = array<i32: 1>} : vector<16x256xi32>
    %c16_i32 = arith.constant 16 : i32
    %c0_i32 = arith.constant 0 : i32
    %1 = arith.cmpi eq, %c16_i32, %c0_i32 : i32
    %c1_i32 = arith.constant 1 : i32
    %2 = arith.select %1, %c1_i32, %c16_i32 : i32
    %3 = vector.broadcast %2 : i32 to vector<16x256xi32>
    %4 = arith.remsi %0, %3 : vector<16x256xi32>
    %c0_i32_0 = arith.constant 0 : i32
    %5 = vector.broadcast %c0_i32_0 : i32 to vector<16x256xi32>
    %6 = arith.cmpi ne, %4, %5 : vector<16x256xi32>
    %c0_i32_1 = arith.constant 0 : i32
    %7 = vector.broadcast %c0_i32_1 : i32 to vector<16x256xi32>
    %8 = arith.cmpi slt, %4, %7 : vector<16x256xi32>
    %c0_i32_2 = arith.constant 0 : i32
    %9 = arith.cmpi slt, %2, %c0_i32_2 : i32
    %10 = vector.broadcast %9 : i1 to vector<16x256xi1>
    %11 = vector.broadcast %10 : vector<16x256xi1> to vector<16x256xi1>
    %12 = arith.xori %8, %11 : vector<16x256xi1>
    %13 = arith.andi %12, %6 : vector<16x256xi1>
    %14 = vector.broadcast %2 : i32 to vector<16x256xi32>
    %15 = arith.addi %4, %14 : vector<16x256xi32>
    %16 = arith.select %13, %15, %4 : vector<16x256xi1>, vector<16x256xi32>
    %c1_i32_3 = arith.constant 1 : i32
    %17 = vector.broadcast %c1_i32_3 : i32 to vector<16x256xi32>
    %18 = arith.cmpi sge, %16, %17 : vector<16x256xi32>
    %19 = arith.extui %18 : vector<16x256xi1> to vector<16x256xi32>
    %20 = arith.sitofp %19 : vector<16x256xi32> to vector<16x256xf32>
    %c14_i32 = arith.constant 14 : i32
    %21 = vector.broadcast %c14_i32 : i32 to vector<16x256xi32>
    %22 = arith.cmpi sle, %16, %21 : vector<16x256xi32>
    %23 = arith.extui %22 : vector<16x256xi1> to vector<16x256xi32>
    %24 = arith.sitofp %23 : vector<16x256xi32> to vector<16x256xf32>
    %c0 = arith.constant 0 : index
    %c0_4 = arith.constant 0 : index
    %c0_5 = arith.constant 0 : index
    %25 = vector.load %arg1[%c0, %c0_4, %c0_5] : memref<1x16x256xf32, #tpu.memory_space<vmem>>, vector<1x16x256xf32>
    %26 = vector.shape_cast %25 : vector<1x16x256xf32> to vector<16x256xf32>
    %c0_6 = arith.constant 0 : index
    %c0_7 = arith.constant 0 : index
    %c0_8 = arith.constant 0 : index
    %27 = vector.load %arg2[%c0_6, %c0_7, %c0_8] : memref<2x16x144xf32, #tpu.memory_space<vmem>>, vector<1x16x144xf32>
    %28 = vector.shape_cast %27 : vector<1x16x144xf32> to vector<16x144xf32>
    %c0_9 = arith.constant 0 : index
    %c0_10 = arith.constant 0 : index
    %c0_11 = arith.constant 0 : index
    %29 = vector.load %arg3[%c0_9, %c0_10, %c0_11] : memref<2x16x1xf32, #tpu.memory_space<vmem>>, vector<1x16x1xf32>
    %30 = vector.shape_cast %29 : vector<1x16x1xf32> to vector<16x1xf32>
    %cst = arith.constant 0.000000e+00 : f32
    %31 = vector.broadcast %cst : f32 to vector<16x17xf32>
    %32 = tpu.concatenate %31, %26, %31 in 1 : vector<16x17xf32>, vector<16x256xf32>, vector<16x17xf32> -> vector<16x290xf32>
    %33 = vector.extract_strided_slice %32 {offsets = [0, 0], sizes = [16, 256], strides = [1, 1]} : vector<16x290xf32> to vector<16x256xf32>
    %34 = arith.mulf %33, %20 : vector<16x256xf32>
    %35 = vector.extract_strided_slice %32 {offsets = [0, 1], sizes = [16, 256], strides = [1, 1]} : vector<16x290xf32> to vector<16x256xf32>
    %36 = vector.extract_strided_slice %32 {offsets = [0, 2], sizes = [16, 256], strides = [1, 1]} : vector<16x290xf32> to vector<16x256xf32>
    %37 = arith.mulf %36, %24 : vector<16x256xf32>
    %38 = vector.extract_strided_slice %32 {offsets = [0, 16], sizes = [16, 256], strides = [1, 1]} : vector<16x290xf32> to vector<16x256xf32>
    %39 = arith.mulf %38, %20 : vector<16x256xf32>
    %40 = vector.extract_strided_slice %32 {offsets = [0, 17], sizes = [16, 256], strides = [1, 1]} : vector<16x290xf32> to vector<16x256xf32>
    %41 = vector.extract_strided_slice %32 {offsets = [0, 18], sizes = [16, 256], strides = [1, 1]} : vector<16x290xf32> to vector<16x256xf32>
    %42 = arith.mulf %41, %24 : vector<16x256xf32>
    %43 = vector.extract_strided_slice %32 {offsets = [0, 32], sizes = [16, 256], strides = [1, 1]} : vector<16x290xf32> to vector<16x256xf32>
    %44 = arith.mulf %43, %20 : vector<16x256xf32>
    %45 = vector.extract_strided_slice %32 {offsets = [0, 33], sizes = [16, 256], strides = [1, 1]} : vector<16x290xf32> to vector<16x256xf32>
    %46 = vector.extract_strided_slice %32 {offsets = [0, 34], sizes = [16, 256], strides = [1, 1]} : vector<16x290xf32> to vector<16x256xf32>
    %47 = arith.mulf %46, %24 : vector<16x256xf32>
    %48 = tpu.concatenate %34, %35, %37, %39, %40, %42, %44, %45, %47 in 0 : vector<16x256xf32>, vector<16x256xf32>, vector<16x256xf32>, vector<16x256xf32>, vector<16x256xf32>, vector<16x256xf32>, vector<16x256xf32>, vector<16x256xf32>, vector<16x256xf32> -> vector<144x256xf32>
    %cst_12 = arith.constant dense<0.000000e+00> : vector<16x256xf32>
    %49 = tpu.matmul %28, %48, %cst_12 {dimension_numbers = #tpu.dot_dimension_numbers<[1], [0], [0], [1], [0, 0, 1, 1], [], []>} : vector<16x144xf32>, vector<144x256xf32>, vector<16x256xf32> -> vector<16x256xf32>
    %50 = vector.broadcast %30 : vector<16x1xf32> to vector<16x256xf32>
    %51 = arith.addf %49, %50 : vector<16x256xf32>
    %cst_13 = arith.constant 0.000000e+00 : f32
    %52 = vector.broadcast %cst_13 : f32 to vector<16x256xf32>
    %53 = arith.maximumf %51, %52 : vector<16x256xf32>
    %c0_14 = arith.constant 0 : index
    %c0_15 = arith.constant 0 : index
    %c0_16 = arith.constant 0 : index
    %54 = vector.load %arg4[%c0_14, %c0_15, %c0_16] : memref<2x16x144xf32, #tpu.memory_space<vmem>>, vector<1x16x144xf32>
    %55 = vector.shape_cast %54 : vector<1x16x144xf32> to vector<16x144xf32>
    %c0_17 = arith.constant 0 : index
    %c0_18 = arith.constant 0 : index
    %c0_19 = arith.constant 0 : index
    %56 = vector.load %arg5[%c0_17, %c0_18, %c0_19] : memref<2x16x1xf32, #tpu.memory_space<vmem>>, vector<1x16x1xf32>
    %57 = vector.shape_cast %56 : vector<1x16x1xf32> to vector<16x1xf32>
    %cst_20 = arith.constant 0.000000e+00 : f32
    %58 = vector.broadcast %cst_20 : f32 to vector<16x17xf32>
    %59 = tpu.concatenate %58, %53, %58 in 1 : vector<16x17xf32>, vector<16x256xf32>, vector<16x17xf32> -> vector<16x290xf32>
    %60 = vector.extract_strided_slice %59 {offsets = [0, 0], sizes = [16, 256], strides = [1, 1]} : vector<16x290xf32> to vector<16x256xf32>
    %61 = arith.mulf %60, %20 : vector<16x256xf32>
    %62 = vector.extract_strided_slice %59 {offsets = [0, 1], sizes = [16, 256], strides = [1, 1]} : vector<16x290xf32> to vector<16x256xf32>
    %63 = vector.extract_strided_slice %59 {offsets = [0, 2], sizes = [16, 256], strides = [1, 1]} : vector<16x290xf32> to vector<16x256xf32>
    %64 = arith.mulf %63, %24 : vector<16x256xf32>
    %65 = vector.extract_strided_slice %59 {offsets = [0, 16], sizes = [16, 256], strides = [1, 1]} : vector<16x290xf32> to vector<16x256xf32>
    %66 = arith.mulf %65, %20 : vector<16x256xf32>
    %67 = vector.extract_strided_slice %59 {offsets = [0, 17], sizes = [16, 256], strides = [1, 1]} : vector<16x290xf32> to vector<16x256xf32>
    %68 = vector.extract_strided_slice %59 {offsets = [0, 18], sizes = [16, 256], strides = [1, 1]} : vector<16x290xf32> to vector<16x256xf32>
    %69 = arith.mulf %68, %24 : vector<16x256xf32>
    %70 = vector.extract_strided_slice %59 {offsets = [0, 32], sizes = [16, 256], strides = [1, 1]} : vector<16x290xf32> to vector<16x256xf32>
    %71 = arith.mulf %70, %20 : vector<16x256xf32>
    %72 = vector.extract_strided_slice %59 {offsets = [0, 33], sizes = [16, 256], strides = [1, 1]} : vector<16x290xf32> to vector<16x256xf32>
    %73 = vector.extract_strided_slice %59 {offsets = [0, 34], sizes = [16, 256], strides = [1, 1]} : vector<16x290xf32> to vector<16x256xf32>
    %74 = arith.mulf %73, %24 : vector<16x256xf32>
    %75 = tpu.concatenate %61, %62, %64, %66, %67, %69, %71, %72, %74 in 0 : vector<16x256xf32>, vector<16x256xf32>, vector<16x256xf32>, vector<16x256xf32>, vector<16x256xf32>, vector<16x256xf32>, vector<16x256xf32>, vector<16x256xf32>, vector<16x256xf32> -> vector<144x256xf32>
    %cst_21 = arith.constant dense<0.000000e+00> : vector<16x256xf32>
    %76 = tpu.matmul %55, %75, %cst_21 {dimension_numbers = #tpu.dot_dimension_numbers<[1], [0], [0], [1], [0, 0, 1, 1], [], []>} : vector<16x144xf32>, vector<144x256xf32>, vector<16x256xf32> -> vector<16x256xf32>
    %77 = vector.broadcast %57 : vector<16x1xf32> to vector<16x256xf32>
    %78 = arith.addf %76, %77 : vector<16x256xf32>
    %cst_22 = arith.constant dense<0.000000e+00> : vector<16xf32>
    %79 = vector.multi_reduction <add>, %78, %cst_22 [1] : vector<16x256xf32> to vector<16xf32>
    %80 = vector.shape_cast %79 : vector<16xf32> to vector<16x1xf32>
    %cst_23 = arith.constant 3.906250e-03 : f32
    %81 = vector.broadcast %cst_23 : f32 to vector<16x1xf32>
    %82 = arith.mulf %80, %81 : vector<16x1xf32>
    %c0_24 = arith.constant 0 : index
    %c0_25 = arith.constant 0 : index
    %c0_26 = arith.constant 0 : index
    %83 = vector.load %arg6[%c0_24, %c0_25, %c0_26] : memref<2x4x16xf32, #tpu.memory_space<vmem>>, vector<1x4x16xf32>
    %84 = vector.shape_cast %83 : vector<1x4x16xf32> to vector<4x16xf32>
    %cst_27 = arith.constant dense<0.000000e+00> : vector<4x1xf32>
    %85 = tpu.matmul %84, %82, %cst_27 {dimension_numbers = #tpu.dot_dimension_numbers<[1], [0], [0], [1], [0, 0, 1, 1], [], []>} : vector<4x16xf32>, vector<16x1xf32>, vector<4x1xf32> -> vector<4x1xf32>
    %c0_28 = arith.constant 0 : index
    %c0_29 = arith.constant 0 : index
    %c0_30 = arith.constant 0 : index
    %86 = vector.load %arg7[%c0_28, %c0_29, %c0_30] : memref<2x4x1xf32, #tpu.memory_space<vmem>>, vector<1x4x1xf32>
    %87 = vector.shape_cast %86 : vector<1x4x1xf32> to vector<4x1xf32>
    %88 = arith.addf %85, %87 : vector<4x1xf32>
    %cst_31 = arith.constant 0.000000e+00 : f32
    %89 = vector.broadcast %cst_31 : f32 to vector<4x1xf32>
    %90 = arith.maximumf %88, %89 : vector<4x1xf32>
    %c0_32 = arith.constant 0 : index
    %c0_33 = arith.constant 0 : index
    %c0_34 = arith.constant 0 : index
    %91 = vector.load %arg8[%c0_32, %c0_33, %c0_34] : memref<2x16x4xf32, #tpu.memory_space<vmem>>, vector<1x16x4xf32>
    %92 = vector.shape_cast %91 : vector<1x16x4xf32> to vector<16x4xf32>
    %cst_35 = arith.constant dense<0.000000e+00> : vector<16x1xf32>
    %93 = tpu.matmul %92, %90, %cst_35 {dimension_numbers = #tpu.dot_dimension_numbers<[1], [0], [0], [1], [0, 0, 1, 1], [], []>} : vector<16x4xf32>, vector<4x1xf32>, vector<16x1xf32> -> vector<16x1xf32>
    %c0_36 = arith.constant 0 : index
    %c0_37 = arith.constant 0 : index
    %c0_38 = arith.constant 0 : index
    %94 = vector.load %arg9[%c0_36, %c0_37, %c0_38] : memref<2x16x1xf32, #tpu.memory_space<vmem>>, vector<1x16x1xf32>
    %95 = vector.shape_cast %94 : vector<1x16x1xf32> to vector<16x1xf32>
    %96 = arith.addf %93, %95 : vector<16x1xf32>
    %97 = arith.negf %96 : vector<16x1xf32>
    %98 = math.exp %97 : vector<16x1xf32>
    %cst_39 = arith.constant 1.000000e+00 : f32
    %99 = vector.broadcast %cst_39 : f32 to vector<16x1xf32>
    %100 = arith.addf %99, %98 : vector<16x1xf32>
    %101 = arith.divf %99, %100 : vector<16x1xf32>
    %102 = vector.broadcast %101 : vector<16x1xf32> to vector<16x256xf32>
    %103 = arith.mulf %78, %102 : vector<16x256xf32>
    %104 = arith.addf %103, %26 : vector<16x256xf32>
    %c1 = arith.constant 1 : index
    %c0_40 = arith.constant 0 : index
    %c0_41 = arith.constant 0 : index
    %105 = vector.load %arg2[%c1, %c0_40, %c0_41] : memref<2x16x144xf32, #tpu.memory_space<vmem>>, vector<1x16x144xf32>
    %106 = vector.shape_cast %105 : vector<1x16x144xf32> to vector<16x144xf32>
    %c1_42 = arith.constant 1 : index
    %c0_43 = arith.constant 0 : index
    %c0_44 = arith.constant 0 : index
    %107 = vector.load %arg3[%c1_42, %c0_43, %c0_44] : memref<2x16x1xf32, #tpu.memory_space<vmem>>, vector<1x16x1xf32>
    %108 = vector.shape_cast %107 : vector<1x16x1xf32> to vector<16x1xf32>
    %cst_45 = arith.constant 0.000000e+00 : f32
    %109 = vector.broadcast %cst_45 : f32 to vector<16x17xf32>
    %110 = tpu.concatenate %109, %104, %109 in 1 : vector<16x17xf32>, vector<16x256xf32>, vector<16x17xf32> -> vector<16x290xf32>
    %111 = vector.extract_strided_slice %110 {offsets = [0, 0], sizes = [16, 256], strides = [1, 1]} : vector<16x290xf32> to vector<16x256xf32>
    %112 = arith.mulf %111, %20 : vector<16x256xf32>
    %113 = vector.extract_strided_slice %110 {offsets = [0, 1], sizes = [16, 256], strides = [1, 1]} : vector<16x290xf32> to vector<16x256xf32>
    %114 = vector.extract_strided_slice %110 {offsets = [0, 2], sizes = [16, 256], strides = [1, 1]} : vector<16x290xf32> to vector<16x256xf32>
    %115 = arith.mulf %114, %24 : vector<16x256xf32>
    %116 = vector.extract_strided_slice %110 {offsets = [0, 16], sizes = [16, 256], strides = [1, 1]} : vector<16x290xf32> to vector<16x256xf32>
    %117 = arith.mulf %116, %20 : vector<16x256xf32>
    %118 = vector.extract_strided_slice %110 {offsets = [0, 17], sizes = [16, 256], strides = [1, 1]} : vector<16x290xf32> to vector<16x256xf32>
    %119 = vector.extract_strided_slice %110 {offsets = [0, 18], sizes = [16, 256], strides = [1, 1]} : vector<16x290xf32> to vector<16x256xf32>
    %120 = arith.mulf %119, %24 : vector<16x256xf32>
    %121 = vector.extract_strided_slice %110 {offsets = [0, 32], sizes = [16, 256], strides = [1, 1]} : vector<16x290xf32> to vector<16x256xf32>
    %122 = arith.mulf %121, %20 : vector<16x256xf32>
    %123 = vector.extract_strided_slice %110 {offsets = [0, 33], sizes = [16, 256], strides = [1, 1]} : vector<16x290xf32> to vector<16x256xf32>
    %124 = vector.extract_strided_slice %110 {offsets = [0, 34], sizes = [16, 256], strides = [1, 1]} : vector<16x290xf32> to vector<16x256xf32>
    %125 = arith.mulf %124, %24 : vector<16x256xf32>
    %126 = tpu.concatenate %112, %113, %115, %117, %118, %120, %122, %123, %125 in 0 : vector<16x256xf32>, vector<16x256xf32>, vector<16x256xf32>, vector<16x256xf32>, vector<16x256xf32>, vector<16x256xf32>, vector<16x256xf32>, vector<16x256xf32>, vector<16x256xf32> -> vector<144x256xf32>
    %cst_46 = arith.constant dense<0.000000e+00> : vector<16x256xf32>
    %127 = tpu.matmul %106, %126, %cst_46 {dimension_numbers = #tpu.dot_dimension_numbers<[1], [0], [0], [1], [0, 0, 1, 1], [], []>} : vector<16x144xf32>, vector<144x256xf32>, vector<16x256xf32> -> vector<16x256xf32>
    %128 = vector.broadcast %108 : vector<16x1xf32> to vector<16x256xf32>
    %129 = arith.addf %127, %128 : vector<16x256xf32>
    %cst_47 = arith.constant 0.000000e+00 : f32
    %130 = vector.broadcast %cst_47 : f32 to vector<16x256xf32>
    %131 = arith.maximumf %129, %130 : vector<16x256xf32>
    %c1_48 = arith.constant 1 : index
    %c0_49 = arith.constant 0 : index
    %c0_50 = arith.constant 0 : index
    %132 = vector.load %arg4[%c1_48, %c0_49, %c0_50] : memref<2x16x144xf32, #tpu.memory_space<vmem>>, vector<1x16x144xf32>
    %133 = vector.shape_cast %132 : vector<1x16x144xf32> to vector<16x144xf32>
    %c1_51 = arith.constant 1 : index
    %c0_52 = arith.constant 0 : index
    %c0_53 = arith.constant 0 : index
    %134 = vector.load %arg5[%c1_51, %c0_52, %c0_53] : memref<2x16x1xf32, #tpu.memory_space<vmem>>, vector<1x16x1xf32>
    %135 = vector.shape_cast %134 : vector<1x16x1xf32> to vector<16x1xf32>
    %cst_54 = arith.constant 0.000000e+00 : f32
    %136 = vector.broadcast %cst_54 : f32 to vector<16x17xf32>
    %137 = tpu.concatenate %136, %131, %136 in 1 : vector<16x17xf32>, vector<16x256xf32>, vector<16x17xf32> -> vector<16x290xf32>
    %138 = vector.extract_strided_slice %137 {offsets = [0, 0], sizes = [16, 256], strides = [1, 1]} : vector<16x290xf32> to vector<16x256xf32>
    %139 = arith.mulf %138, %20 : vector<16x256xf32>
    %140 = vector.extract_strided_slice %137 {offsets = [0, 1], sizes = [16, 256], strides = [1, 1]} : vector<16x290xf32> to vector<16x256xf32>
    %141 = vector.extract_strided_slice %137 {offsets = [0, 2], sizes = [16, 256], strides = [1, 1]} : vector<16x290xf32> to vector<16x256xf32>
    %142 = arith.mulf %141, %24 : vector<16x256xf32>
    %143 = vector.extract_strided_slice %137 {offsets = [0, 16], sizes = [16, 256], strides = [1, 1]} : vector<16x290xf32> to vector<16x256xf32>
    %144 = arith.mulf %143, %20 : vector<16x256xf32>
    %145 = vector.extract_strided_slice %137 {offsets = [0, 17], sizes = [16, 256], strides = [1, 1]} : vector<16x290xf32> to vector<16x256xf32>
    %146 = vector.extract_strided_slice %137 {offsets = [0, 18], sizes = [16, 256], strides = [1, 1]} : vector<16x290xf32> to vector<16x256xf32>
    %147 = arith.mulf %146, %24 : vector<16x256xf32>
    %148 = vector.extract_strided_slice %137 {offsets = [0, 32], sizes = [16, 256], strides = [1, 1]} : vector<16x290xf32> to vector<16x256xf32>
    %149 = arith.mulf %148, %20 : vector<16x256xf32>
    %150 = vector.extract_strided_slice %137 {offsets = [0, 33], sizes = [16, 256], strides = [1, 1]} : vector<16x290xf32> to vector<16x256xf32>
    %151 = vector.extract_strided_slice %137 {offsets = [0, 34], sizes = [16, 256], strides = [1, 1]} : vector<16x290xf32> to vector<16x256xf32>
    %152 = arith.mulf %151, %24 : vector<16x256xf32>
    %153 = tpu.concatenate %139, %140, %142, %144, %145, %147, %149, %150, %152 in 0 : vector<16x256xf32>, vector<16x256xf32>, vector<16x256xf32>, vector<16x256xf32>, vector<16x256xf32>, vector<16x256xf32>, vector<16x256xf32>, vector<16x256xf32>, vector<16x256xf32> -> vector<144x256xf32>
    %cst_55 = arith.constant dense<0.000000e+00> : vector<16x256xf32>
    %154 = tpu.matmul %133, %153, %cst_55 {dimension_numbers = #tpu.dot_dimension_numbers<[1], [0], [0], [1], [0, 0, 1, 1], [], []>} : vector<16x144xf32>, vector<144x256xf32>, vector<16x256xf32> -> vector<16x256xf32>
    %155 = vector.broadcast %135 : vector<16x1xf32> to vector<16x256xf32>
    %156 = arith.addf %154, %155 : vector<16x256xf32>
    %cst_56 = arith.constant dense<0.000000e+00> : vector<16xf32>
    %157 = vector.multi_reduction <add>, %156, %cst_56 [1] : vector<16x256xf32> to vector<16xf32>
    %158 = vector.shape_cast %157 : vector<16xf32> to vector<16x1xf32>
    %cst_57 = arith.constant 3.906250e-03 : f32
    %159 = vector.broadcast %cst_57 : f32 to vector<16x1xf32>
    %160 = arith.mulf %158, %159 : vector<16x1xf32>
    %c1_58 = arith.constant 1 : index
    %c0_59 = arith.constant 0 : index
    %c0_60 = arith.constant 0 : index
    %161 = vector.load %arg6[%c1_58, %c0_59, %c0_60] : memref<2x4x16xf32, #tpu.memory_space<vmem>>, vector<1x4x16xf32>
    %162 = vector.shape_cast %161 : vector<1x4x16xf32> to vector<4x16xf32>
    %cst_61 = arith.constant dense<0.000000e+00> : vector<4x1xf32>
    %163 = tpu.matmul %162, %160, %cst_61 {dimension_numbers = #tpu.dot_dimension_numbers<[1], [0], [0], [1], [0, 0, 1, 1], [], []>} : vector<4x16xf32>, vector<16x1xf32>, vector<4x1xf32> -> vector<4x1xf32>
    %c1_62 = arith.constant 1 : index
    %c0_63 = arith.constant 0 : index
    %c0_64 = arith.constant 0 : index
    %164 = vector.load %arg7[%c1_62, %c0_63, %c0_64] : memref<2x4x1xf32, #tpu.memory_space<vmem>>, vector<1x4x1xf32>
    %165 = vector.shape_cast %164 : vector<1x4x1xf32> to vector<4x1xf32>
    %166 = arith.addf %163, %165 : vector<4x1xf32>
    %cst_65 = arith.constant 0.000000e+00 : f32
    %167 = vector.broadcast %cst_65 : f32 to vector<4x1xf32>
    %168 = arith.maximumf %166, %167 : vector<4x1xf32>
    %c1_66 = arith.constant 1 : index
    %c0_67 = arith.constant 0 : index
    %c0_68 = arith.constant 0 : index
    %169 = vector.load %arg8[%c1_66, %c0_67, %c0_68] : memref<2x16x4xf32, #tpu.memory_space<vmem>>, vector<1x16x4xf32>
    %170 = vector.shape_cast %169 : vector<1x16x4xf32> to vector<16x4xf32>
    %cst_69 = arith.constant dense<0.000000e+00> : vector<16x1xf32>
    %171 = tpu.matmul %170, %168, %cst_69 {dimension_numbers = #tpu.dot_dimension_numbers<[1], [0], [0], [1], [0, 0, 1, 1], [], []>} : vector<16x4xf32>, vector<4x1xf32>, vector<16x1xf32> -> vector<16x1xf32>
    %c1_70 = arith.constant 1 : index
    %c0_71 = arith.constant 0 : index
    %c0_72 = arith.constant 0 : index
    %172 = vector.load %arg9[%c1_70, %c0_71, %c0_72] : memref<2x16x1xf32, #tpu.memory_space<vmem>>, vector<1x16x1xf32>
    %173 = vector.shape_cast %172 : vector<1x16x1xf32> to vector<16x1xf32>
    %174 = arith.addf %171, %173 : vector<16x1xf32>
    %175 = arith.negf %174 : vector<16x1xf32>
    %176 = math.exp %175 : vector<16x1xf32>
    %cst_73 = arith.constant 1.000000e+00 : f32
    %177 = vector.broadcast %cst_73 : f32 to vector<16x1xf32>
    %178 = arith.addf %177, %176 : vector<16x1xf32>
    %179 = arith.divf %177, %178 : vector<16x1xf32>
    %180 = vector.broadcast %179 : vector<16x1xf32> to vector<16x256xf32>
    %181 = arith.mulf %156, %180 : vector<16x256xf32>
    %182 = arith.addf %181, %104 : vector<16x256xf32>
    %c0_74 = arith.constant 0 : index
    %c0_75 = arith.constant 0 : index
    %183 = vector.load %arg10[%c0_74, %c0_75] : memref<16x144xf32, #tpu.memory_space<vmem>>, vector<16x144xf32>
    %c0_76 = arith.constant 0 : index
    %c0_77 = arith.constant 0 : index
    %184 = vector.load %arg11[%c0_76, %c0_77] : memref<16x1xf32, #tpu.memory_space<vmem>>, vector<16x1xf32>
    %cst_78 = arith.constant 0.000000e+00 : f32
    %185 = vector.broadcast %cst_78 : f32 to vector<16x17xf32>
    %186 = tpu.concatenate %185, %182, %185 in 1 : vector<16x17xf32>, vector<16x256xf32>, vector<16x17xf32> -> vector<16x290xf32>
    %187 = vector.extract_strided_slice %186 {offsets = [0, 0], sizes = [16, 256], strides = [1, 1]} : vector<16x290xf32> to vector<16x256xf32>
    %188 = arith.mulf %187, %20 : vector<16x256xf32>
    %189 = vector.extract_strided_slice %186 {offsets = [0, 1], sizes = [16, 256], strides = [1, 1]} : vector<16x290xf32> to vector<16x256xf32>
    %190 = vector.extract_strided_slice %186 {offsets = [0, 2], sizes = [16, 256], strides = [1, 1]} : vector<16x290xf32> to vector<16x256xf32>
    %191 = arith.mulf %190, %24 : vector<16x256xf32>
    %192 = vector.extract_strided_slice %186 {offsets = [0, 16], sizes = [16, 256], strides = [1, 1]} : vector<16x290xf32> to vector<16x256xf32>
    %193 = arith.mulf %192, %20 : vector<16x256xf32>
    %194 = vector.extract_strided_slice %186 {offsets = [0, 17], sizes = [16, 256], strides = [1, 1]} : vector<16x290xf32> to vector<16x256xf32>
    %195 = vector.extract_strided_slice %186 {offsets = [0, 18], sizes = [16, 256], strides = [1, 1]} : vector<16x290xf32> to vector<16x256xf32>
    %196 = arith.mulf %195, %24 : vector<16x256xf32>
    %197 = vector.extract_strided_slice %186 {offsets = [0, 32], sizes = [16, 256], strides = [1, 1]} : vector<16x290xf32> to vector<16x256xf32>
    %198 = arith.mulf %197, %20 : vector<16x256xf32>
    %199 = vector.extract_strided_slice %186 {offsets = [0, 33], sizes = [16, 256], strides = [1, 1]} : vector<16x290xf32> to vector<16x256xf32>
    %200 = vector.extract_strided_slice %186 {offsets = [0, 34], sizes = [16, 256], strides = [1, 1]} : vector<16x290xf32> to vector<16x256xf32>
    %201 = arith.mulf %200, %24 : vector<16x256xf32>
    %202 = tpu.concatenate %188, %189, %191, %193, %194, %196, %198, %199, %201 in 0 : vector<16x256xf32>, vector<16x256xf32>, vector<16x256xf32>, vector<16x256xf32>, vector<16x256xf32>, vector<16x256xf32>, vector<16x256xf32>, vector<16x256xf32>, vector<16x256xf32> -> vector<144x256xf32>
    %cst_79 = arith.constant dense<0.000000e+00> : vector<16x256xf32>
    %203 = tpu.matmul %183, %202, %cst_79 {dimension_numbers = #tpu.dot_dimension_numbers<[1], [0], [0], [1], [0, 0, 1, 1], [], []>} : vector<16x144xf32>, vector<144x256xf32>, vector<16x256xf32> -> vector<16x256xf32>
    %204 = vector.broadcast %184 : vector<16x1xf32> to vector<16x256xf32>
    %205 = arith.addf %203, %204 : vector<16x256xf32>
    %206 = arith.addf %205, %26 : vector<16x256xf32>
    %c0_80 = arith.constant 0 : index
    %c0_81 = arith.constant 0 : index
    %c0_82 = arith.constant 0 : index
    %207 = vector.load %arg12[%c0_80, %c0_81, %c0_82] : memref<1x16x256xf32, #tpu.memory_space<vmem>>, vector<1x16x256xf32>
    %208 = vector.shape_cast %207 : vector<1x16x256xf32> to vector<16x256xf32>
    %209 = vector.shape_cast %206 : vector<16x256xf32> to vector<1x16x256xf32>
    tpu.vector_store %arg12[%c0_80, %c0_81, %c0_82], %209 {strides = array<i32>} : memref<1x16x256xf32, #tpu.memory_space<vmem>>, vector<1x16x256xf32>,
    return
  }
  func.func @transform_0(%arg0: i32) -> (i32, i32, i32) {
    %c0_i32 = arith.constant 0 : i32
    %c0_i32_0 = arith.constant 0 : i32
    %c0_i32_1 = arith.constant 0 : i32
    return %arg0, %c0_i32, %c0_i32_0 : i32, i32, i32
  }
  func.func @transform_1(%arg0: i32) -> (i32, i32, i32) {
    %c0_i32 = arith.constant 0 : i32
    %c0_i32_0 = arith.constant 0 : i32
    %c0_i32_1 = arith.constant 0 : i32
    %c0_i32_2 = arith.constant 0 : i32
    return %c0_i32, %c0_i32_0, %c0_i32_1 : i32, i32, i32
  }
  func.func @transform_2(%arg0: i32) -> (i32, i32, i32) {
    %c0_i32 = arith.constant 0 : i32
    %c0_i32_0 = arith.constant 0 : i32
    %c0_i32_1 = arith.constant 0 : i32
    %c0_i32_2 = arith.constant 0 : i32
    return %c0_i32, %c0_i32_0, %c0_i32_1 : i32, i32, i32
  }
  func.func @transform_3(%arg0: i32) -> (i32, i32, i32) {
    %c0_i32 = arith.constant 0 : i32
    %c0_i32_0 = arith.constant 0 : i32
    %c0_i32_1 = arith.constant 0 : i32
    %c0_i32_2 = arith.constant 0 : i32
    return %c0_i32, %c0_i32_0, %c0_i32_1 : i32, i32, i32
  }
  func.func @transform_4(%arg0: i32) -> (i32, i32, i32) {
    %c0_i32 = arith.constant 0 : i32
    %c0_i32_0 = arith.constant 0 : i32
    %c0_i32_1 = arith.constant 0 : i32
    %c0_i32_2 = arith.constant 0 : i32
    return %c0_i32, %c0_i32_0, %c0_i32_1 : i32, i32, i32
  }
  func.func @transform_5(%arg0: i32) -> (i32, i32, i32) {
    %c0_i32 = arith.constant 0 : i32
    %c0_i32_0 = arith.constant 0 : i32
    %c0_i32_1 = arith.constant 0 : i32
    %c0_i32_2 = arith.constant 0 : i32
    return %c0_i32, %c0_i32_0, %c0_i32_1 : i32, i32, i32
  }
  func.func @transform_6(%arg0: i32) -> (i32, i32, i32) {
    %c0_i32 = arith.constant 0 : i32
    %c0_i32_0 = arith.constant 0 : i32
    %c0_i32_1 = arith.constant 0 : i32
    %c0_i32_2 = arith.constant 0 : i32
    return %c0_i32, %c0_i32_0, %c0_i32_1 : i32, i32, i32
  }
  func.func @transform_7(%arg0: i32) -> (i32, i32, i32) {
    %c0_i32 = arith.constant 0 : i32
    %c0_i32_0 = arith.constant 0 : i32
    %c0_i32_1 = arith.constant 0 : i32
    %c0_i32_2 = arith.constant 0 : i32
    return %c0_i32, %c0_i32_0, %c0_i32_1 : i32, i32, i32
  }
  func.func @transform_8(%arg0: i32) -> (i32, i32, i32) {
    %c0_i32 = arith.constant 0 : i32
    %c0_i32_0 = arith.constant 0 : i32
    %c0_i32_1 = arith.constant 0 : i32
    %c0_i32_2 = arith.constant 0 : i32
    return %c0_i32, %c0_i32_0, %c0_i32_1 : i32, i32, i32
  }
  func.func @transform_9(%arg0: i32) -> (i32, i32) {
    %c0_i32 = arith.constant 0 : i32
    %c0_i32_0 = arith.constant 0 : i32
    %c0_i32_1 = arith.constant 0 : i32
    return %c0_i32, %c0_i32_0 : i32, i32
  }
  func.func @transform_10(%arg0: i32) -> (i32, i32) {
    %c0_i32 = arith.constant 0 : i32
    %c0_i32_0 = arith.constant 0 : i32
    %c0_i32_1 = arith.constant 0 : i32
    return %c0_i32, %c0_i32_0 : i32, i32
  }
  func.func @transform_11(%arg0: i32) -> (i32, i32, i32) {
    %c0_i32 = arith.constant 0 : i32
    %c0_i32_0 = arith.constant 0 : i32
    %c0_i32_1 = arith.constant 0 : i32
    return %arg0, %c0_i32, %c0_i32_0 : i32, i32, i32
  }
}

</mosaic_0001>

<llo_original>
// kernel: residual_group_forward.1
$region0: #{residual_group_forward.1}
  #allocation0 [shape = 'u32[]', space=smem, size = 0x4, offset = 0x4, fixed_abs, tag = 'smem constant byte address 0x4 - core index']
  #allocation1 [shape = 'u32[144,128]{1,0:T(1,128)}', space=vmem, size = 0x12000, scoped, tag = 'internal scratch']
  %s0 = inlined_call_operand.vmem [shape: f32[2,16,256], index: 0, kind: input, shape index: {}]
  %s1 = inlined_call_operand.vmem [shape: f32[2,16,144], index: 1, kind: input, shape index: {}]
  %s2 = inlined_call_operand.vmem [shape: f32[2,16,1], index: 2, kind: input, shape index: {}]
  %s3 = inlined_call_operand.vmem [shape: f32[2,16,144], index: 3, kind: input, shape index: {}]
  %s4 = inlined_call_operand.vmem [shape: f32[2,16,1], index: 4, kind: input, shape index: {}]
  %s5 = inlined_call_operand.vmem [shape: f32[2,4,16], index: 5, kind: input, shape index: {}]
  %s6 = inlined_call_operand.vmem [shape: f32[2,4,1], index: 6, kind: input, shape index: {}]
  %s7 = inlined_call_operand.vmem [shape: f32[2,16,4], index: 7, kind: input, shape index: {}]
  %s8 = inlined_call_operand.vmem [shape: f32[2,16,1], index: 8, kind: input, shape index: {}]
  %s9 = inlined_call_operand.vmem [shape: f32[16,144], index: 9, kind: input, shape index: {}]
  %s10 = inlined_call_operand.vmem [shape: f32[16,1], index: 10, kind: input, shape index: {}]
  %s11 = inlined_call_operand.vmem [shape: f32[2,16,256], index: 11, kind: output, shape index: {}]
  %s12 = sld [smem:[#allocation0]]
  $region77: #{residual_group_forward.1} parent=0
    _
  %s14 = ssub.s32 1, %s12
  %s15 = scalar_select 0, %s14, %s12
  loop: start=0, step=1, limit=4
  $region2: #{residual_group_forward.1} parent=0 // loop_pre_header
    _
  $region3: #{residual_group_forward.1} parent=0 // loop_header
    %s17 = sphi 0, %s21
    %p18 = scmp.ge.s32.totalorder %s17, 4
    %s27 = sphi 0, %s29
    %s30 = sphi 0, %s27
    %s31 = sphi 0, %s30
    %s47 = sphi 0, %s31
    %s51 = sphi 0, %s51
    %s53 = sphi 0, %s51
    %s54 = sphi 0, %s53
    %s68 = sphi 0, %s54
    %s72 = sphi 0, %s72
    %s74 = sphi 0, %s72
    %s75 = sphi 0, %s74
    %s89 = sphi 0, %s75
    %s93 = sphi 0, %s93
    %s95 = sphi 0, %s93
    %s96 = sphi 0, %s95
    %s110 = sphi 0, %s96
    %s114 = sphi 0, %s114
    %s116 = sphi 0, %s114
    %s117 = sphi 0, %s116
    %s131 = sphi 0, %s117
    %s135 = sphi 0, %s135
    %s137 = sphi 0, %s135
    %s138 = sphi 0, %s137
    %s152 = sphi 0, %s138
    %s156 = sphi 0, %s156
    %s158 = sphi 0, %s156
    %s159 = sphi 0, %s158
    %s173 = sphi 0, %s159
    %s177 = sphi 0, %s177
    %s179 = sphi 0, %s177
    %s180 = sphi 0, %s179
    %s194 = sphi 0, %s180
    %s198 = sphi 0, %s198
    %s200 = sphi 0, %s198
    %s201 = sphi 0, %s200
    %s215 = sphi 0, %s201
    %s219 = sphi 0, %s219
    %s221 = sphi 0, %s219
    %s222 = sphi 0, %s221
    %s236 = sphi 0, %s222
    %s240 = sphi 0, %s240
    %s242 = sphi 0, %s240
    %s243 = sphi 0, %s242
    %s257 = sphi 0, %s243
    %s263 = sphi 0, %s265
    %s266 = sphi 0, %s263
    %s267 = sphi 0, %s266
    %s283 = sphi 0, %s267
  $region4: #{residual_group_forward.1} parent=0 // loop_header_branch
    %20 = sbr.rel (%p18) target = $region8
  $region5: #{residual_group_forward.1} parent=0 // loop_body
    %s22 = ssub.s32 %s17, 1
    %s23 = ssub.s32 %s17, 2
    %s24 = sadd.s32 %s17, 1
    %s25 = ssub.s32 %s17, %s24
    %p26 = scmp.eq.s32.totalorder %s25, 0
    %s28 = sadd.s32 %s27, 1
    %s29 = scalar_select %p26, %s27, %s28
    %p32 = pneg %p26
    %p33 = scmp.eq.s32.totalorder %s17, 1
    %p34 = por %p32, %p33
    %p35 = scmp.ne.s32.totalorder %s27, %s30
    %p36 = scmp.eq.s32.totalorder %s17, 0
    %p37 = por %p35, %p36
    %p38 = scmp.ne.s32.totalorder %s27, %s30
    %p39 = scmp.eq.s32.totalorder %s22, 1
    %p40 = por %p38, %p39
    %p41 = scmp.ne.s32.totalorder %s30, %s31
    %p42 = scmp.eq.s32.totalorder %s22, 0
    %p43 = por %p41, %p42
    %p44 = scmp.ne.s32.totalorder %s30, %s31
    %p45 = scmp.eq.s32.totalorder %s23, 1
    %p46 = por %p44, %p45
    %p48 = scmp.ne.s32.totalorder %s31, %s47
    %p49 = scmp.eq.s32.totalorder %s23, 0
    %p50 = por %p48, %p49
    %s52 = sadd.s32 %s51, 1
    %p55 = scmp.eq.s32.totalorder %s17, 1
    %p56 = scmp.ne.s32.totalorder %s51, %s53
    %p57 = scmp.eq.s32.totalorder %s17, 0
    %p58 = por %p56, %p57
    %p59 = scmp.ne.s32.totalorder %s51, %s53
    %p60 = scmp.eq.s32.totalorder %s22, 1
    %p61 = por %p59, %p60
    %p62 = scmp.ne.s32.totalorder %s53, %s54
    %p63 = scmp.eq.s32.totalorder %s22, 0
    %p64 = por %p62, %p63
    %p65 = scmp.ne.s32.totalorder %s53, %s54
    %p66 = scmp.eq.s32.totalorder %s23, 1
    %p67 = por %p65, %p66
    %p69 = scmp.ne.s32.totalorder %s54, %s68
    %p70 = scmp.eq.s32.totalorder %s23, 0
    %p71 = por %p69, %p70
    %s73 = sadd.s32 %s72, 1
    %p76 = scmp.eq.s32.totalorder %s17, 1
    %p77 = scmp.ne.s32.totalorder %s72, %s74
    %p78 = scmp.eq.s32.totalorder %s17, 0
    %p79 = por %p77, %p78
    %p80 = scmp.ne.s32.totalorder %s72, %s74
    %p81 = scmp.eq.s32.totalorder %s22, 1
    %p82 = por %p80, %p81
    %p83 = scmp.ne.s32.totalorder %s74, %s75
    %p84 = scmp.eq.s32.totalorder %s22, 0
    %p85 = por %p83, %p84
    %p86 = scmp.ne.s32.totalorder %s74, %s75
    %p87 = scmp.eq.s32.totalorder %s23, 1
    %p88 = por %p86, %p87
    %p90 = scmp.ne.s32.totalorder %s75, %s89
    %p91 = scmp.eq.s32.totalorder %s23, 0
    %p92 = por %p90, %p91
    %s94 = sadd.s32 %s93, 1
    %p97 = scmp.eq.s32.totalorder %s17, 1
    %p98 = scmp.ne.s32.totalorder %s93, %s95
    %p99 = scmp.eq.s32.totalorder %s17, 0
    %p100 = por %p98, %p99
    %p101 = scmp.ne.s32.totalorder %s93, %s95
    %p102 = scmp.eq.s32.totalorder %s22, 1
    %p103 = por %p101, %p102
    %p104 = scmp.ne.s32.totalorder %s95, %s96
    %p105 = scmp.eq.s32.totalorder %s22, 0
    %p106 = por %p104, %p105
    %p107 = scmp.ne.s32.totalorder %s95, %s96
    %p108 = scmp.eq.s32.totalorder %s23, 1
    %p109 = por %p107, %p108
    %p111 = scmp.ne.s32.totalorder %s96, %s110
    %p112 = scmp.eq.s32.totalorder %s23, 0
    %p113 = por %p111, %p112
    %s115 = sadd.s32 %s114, 1
    %p118 = scmp.eq.s32.totalorder %s17, 1
    %p119 = scmp.ne.s32.totalorder %s114, %s116
    %p120 = scmp.eq.s32.totalorder %s17, 0
    %p121 = por %p119, %p120
    %p122 = scmp.ne.s32.totalorder %s114, %s116
    %p123 = scmp.eq.s32.totalorder %s22, 1
    %p124 = por %p122, %p123
    %p125 = scmp.ne.s32.totalorder %s116, %s117
    %p126 = scmp.eq.s32.totalorder %s22, 0
    %p127 = por %p125, %p126
    %p128 = scmp.ne.s32.totalorder %s116, %s117
    %p129 = scmp.eq.s32.totalorder %s23, 1
    %p130 = por %p128, %p129
    %p132 = scmp.ne.s32.totalorder %s117, %s131
    %p133 = scmp.eq.s32.totalorder %s23, 0
    %p134 = por %p132, %p133
    %s136 = sadd.s32 %s135, 1
    %p139 = scmp.eq.s32.totalorder %s17, 1
    %p140 = scmp.ne.s32.totalorder %s135, %s137
    %p141 = scmp.eq.s32.totalorder %s17, 0
    %p142 = por %p140, %p141
    %p143 = scmp.ne.s32.totalorder %s135, %s137
    %p144 = scmp.eq.s32.totalorder %s22, 1
    %p145 = por %p143, %p144
    %p146 = scmp.ne.s32.totalorder %s137, %s138
    %p147 = scmp.eq.s32.totalorder %s22, 0
    %p148 = por %p146, %p147
    %p149 = scmp.ne.s32.totalorder %s137, %s138
    %p150 = scmp.eq.s32.totalorder %s23, 1
    %p151 = por %p149, %p150
    %p153 = scmp.ne.s32.totalorder %s138, %s152
    %p154 = scmp.eq.s32.totalorder %s23, 0
    %p155 = por %p153, %p154
    %s157 = sadd.s32 %s156, 1
    %p160 = scmp.eq.s32.totalorder %s17, 1
    %p161 = scmp.ne.s32.totalorder %s156, %s158
    %p162 = scmp.eq.s32.totalorder %s17, 0
    %p163 = por %p161, %p162
    %p164 = scmp.ne.s32.totalorder %s156, %s158
    %p165 = scmp.eq.s32.totalorder %s22, 1
    %p166 = por %p164, %p165
    %p167 = scmp.ne.s32.totalorder %s158, %s159
    %p168 = scmp.eq.s32.totalorder %s22, 0
    %p169 = por %p167, %p168
    %p170 = scmp.ne.s32.totalorder %s158, %s159
    %p171 = scmp.eq.s32.totalorder %s23, 1
    %p172 = por %p170, %p171
    %p174 = scmp.ne.s32.totalorder %s159, %s173
    %p175 = scmp.eq.s32.totalorder %s23, 0
    %p176 = por %p174, %p175
    %s178 = sadd.s32 %s177, 1
    %p181 = scmp.eq.s32.totalorder %s17, 1
    %p182 = scmp.ne.s32.totalorder %s177, %s179
    %p183 = scmp.eq.s32.totalorder %s17, 0
    %p184 = por %p182, %p183
    %p185 = scmp.ne.s32.totalorder %s177, %s179
    %p186 = scmp.eq.s32.totalorder %s22, 1
    %p187 = por %p185, %p186
    %p188 = scmp.ne.s32.totalorder %s179, %s180
    %p189 = scmp.eq.s32.totalorder %s22, 0
    %p190 = por %p188, %p189
    %p191 = scmp.ne.s32.totalorder %s179, %s180
    %p192 = scmp.eq.s32.totalorder %s23, 1
    %p193 = por %p191, %p192
    %p195 = scmp.ne.s32.totalorder %s180, %s194
    %p196 = scmp.eq.s32.totalorder %s23, 0
    %p197 = por %p195, %p196
    %s199 = sadd.s32 %s198, 1
    %p202 = scmp.eq.s32.totalorder %s17, 1
    %p203 = scmp.ne.s32.totalorder %s198, %s200
    %p204 = scmp.eq.s32.totalorder %s17, 0
    %p205 = por %p203, %p204
    %p206 = scmp.ne.s32.totalorder %s198, %s200
    %p207 = scmp.eq.s32.totalorder %s22, 1
    %p208 = por %p206, %p207
    %p209 = scmp.ne.s32.totalorder %s200, %s201
    %p210 = scmp.eq.s32.totalorder %s22, 0
    %p211 = por %p209, %p210
    %p212 = scmp.ne.s32.totalorder %s200, %s201
    %p213 = scmp.eq.s32.totalorder %s23, 1
    %p214 = por %p212, %p213
    %p216 = scmp.ne.s32.totalorder %s201, %s215
    %p217 = scmp.eq.s32.totalorder %s23, 0
    %p218 = por %p216, %p217
    %s220 = sadd.s32 %s219, 1
    %p223 = scmp.eq.s32.totalorder %s17, 1
    %p224 = scmp.ne.s32.totalorder %s219, %s221
    %p225 = scmp.eq.s32.totalorder %s17, 0
    %p226 = por %p224, %p225
    %p227 = scmp.ne.s32.totalorder %s219, %s221
    %p228 = scmp.eq.s32.totalorder %s22, 1
    %p229 = por %p227, %p228
    %p230 = scmp.ne.s32.totalorder %s221, %s222
    %p231 = scmp.eq.s32.totalorder %s22, 0
    %p232 = por %p230, %p231
    %p233 = scmp.ne.s32.totalorder %s221, %s222
    %p234 = scmp.eq.s32.totalorder %s23, 1
    %p235 = por %p233, %p234
    %p237 = scmp.ne.s32.totalorder %s222, %s236
    %p238 = scmp.eq.s32.totalorder %s23, 0
    %p239 = por %p237, %p238
    %s241 = sadd.s32 %s240, 1
    %p244 = scmp.eq.s32.totalorder %s17, 1
    %p245 = scmp.ne.s32.totalorder %s240, %s242
    %p246 = scmp.eq.s32.totalorder %s17, 0
    %p247 = por %p245, %p246
    %p248 = scmp.ne.s32.totalorder %s240, %s242
    %p249 = scmp.eq.s32.totalorder %s22, 1
    %p250 = por %p248, %p249
    %p251 = scmp.ne.s32.totalorder %s242, %s243
    %p252 = scmp.eq.s32.totalorder %s22, 0
    %p253 = por %p251, %p252
    %p254 = scmp.ne.s32.totalorder %s242, %s243
    %p255 = scmp.eq.s32.totalorder %s23, 1
    %p256 = por %p254, %p255
    %p258 = scmp.ne.s32.totalorder %s243, %s257
    %p259 = scmp.eq.s32.totalorder %s23, 0
    %p260 = por %p258, %p259
    %s261 = ssub.s32 %s17, %s24
    %p262 = scmp.eq.s32.totalorder %s261, 0
    %s264 = sadd.s32 %s263, 1
    %s265 = scalar_select %p262, %s263, %s264
    %p268 = pneg %p262
    %p269 = scmp.eq.s32.totalorder %s17, 1
    %p270 = por %p268, %p269
    %p271 = scmp.ne.s32.totalorder %s263, %s266
    %p272 = scmp.eq.s32.totalorder %s17, 0
    %p273 = por %p271, %p272
    %p274 = scmp.ne.s32.totalorder %s263, %s266
    %p275 = scmp.eq.s32.totalorder %s22, 1
    %p276 = por %p274, %p275
    %p277 = scmp.ne.s32.totalorder %s266, %s267
    %p278 = scmp.eq.s32.totalorder %s22, 0
    %p279 = por %p277, %p278
    %p280 = scmp.ne.s32.totalorder %s266, %s267
    %p281 = scmp.eq.s32.totalorder %s23, 1
    %p282 = por %p280, %p281
    %p284 = scmp.ne.s32.totalorder %s267, %s283
    %p285 = scmp.eq.s32.totalorder %s23, 0
    %p286 = por %p284, %p285
    %p287 = scmp.le.s32.totalorder 1, %s17
    %p288 = scmp.lt.s32.totalorder %s17, 3
    %p289 = pnand %p287, %p288
    %p290 = pneg %p289
    // Predicated region
    $region9: #{residual_group_forward.1} parent=5 // pred_check
      _
    $region10: #{residual_group_forward.1} parent=5 // pred_check_branch
      %292 = sbr.rel (%p289) target = $region12
    $region11: #{residual_group_forward.1} parent=5 // pred_region
      %s293 = ssub.s32 %s17, 1
      // Predicated region
      $region13: #{residual_group_forward.1} parent=11 // pred_check
        %p294 = pneg %p64
      $region14: #{residual_group_forward.1} parent=11 // pred_check_branch
        %296 = sbr.rel (%p294) target = $region16
      $region15: #{residual_group_forward.1} parent=11 // pred_region
        _
      $region16: #{residual_group_forward.1} parent=11 // pred_fallthru
        _
      // Predicated region
      $region17: #{residual_group_forward.1} parent=11 // pred_check
        %p297 = pneg %p85
      $region18: #{residual_group_forward.1} parent=11 // pred_check_branch
        %299 = sbr.rel (%p297) target = $region20
      $region19: #{residual_group_forward.1} parent=11 // pred_region
        _
      $region20: #{residual_group_forward.1} parent=11 // pred_fallthru
        _
      // Predicated region
      $region21: #{residual_group_forward.1} parent=11 // pred_check
        %p300 = pneg %p106
      $region22: #{residual_group_forward.1} parent=11 // pred_check_branch
        %302 = sbr.rel (%p300) target = $region24
      $region23: #{residual_group_forward.1} parent=11 // pred_region
        _
      $region24: #{residual_group_forward.1} parent=11 // pred_fallthru
        _
      // Predicated region
      $region25: #{residual_group_forward.1} parent=11 // pred_check
        %p303 = pneg %p127
      $region26: #{residual_group_forward.1} parent=11 // pred_check_branch
        %305 = sbr.rel (%p303) target = $region28
      $region27: #{residual_group_forward.1} parent=11 // pred_region
        _
      $region28: #{residual_group_forward.1} parent=11 // pred_fallthru
        _
      // Predicated region
      $region29: #{residual_group_forward.1} parent=11 // pred_check
        %p306 = pneg %p148
      $region30: #{residual_group_forward.1} parent=11 // pred_check_branch
        %308 = sbr.rel (%p306) target = $region32
      $region31: #{residual_group_forward.1} parent=11 // pred_region
        _
      $region32: #{residual_group_forward.1} parent=11 // pred_fallthru
        _
      // Predicated region
      $region33: #{residual_group_forward.1} parent=11 // pred_check
        %p309 = pneg %p169
      $region34: #{residual_group_forward.1} parent=11 // pred_check_branch
        %311 = sbr.rel (%p309) target = $region36
      $region35: #{residual_group_forward.1} parent=11 // pred_region
        _
      $region36: #{residual_group_forward.1} parent=11 // pred_fallthru
        _
      // Predicated region
      $region37: #{residual_group_forward.1} parent=11 // pred_check
        %p312 = pneg %p190
      $region38: #{residual_group_forward.1} parent=11 // pred_check_branch
        %314 = sbr.rel (%p312) target = $region40
      $region39: #{residual_group_forward.1} parent=11 // pred_region
        _
      $region40: #{residual_group_forward.1} parent=11 // pred_fallthru
        _
      // Predicated region
      $region41: #{residual_group_forward.1} parent=11 // pred_check
        %p315 = pneg %p211
      $region42: #{residual_group_forward.1} parent=11 // pred_check_branch
        %317 = sbr.rel (%p315) target = $region44
      $region43: #{residual_group_forward.1} parent=11 // pred_region
        _
      $region44: #{residual_group_forward.1} parent=11 // pred_fallthru
        _
      // Predicated region
      $region45: #{residual_group_forward.1} parent=11 // pred_check
        %p318 = pneg %p232
      $region46: #{residual_group_forward.1} parent=11 // pred_check_branch
        %320 = sbr.rel (%p318) target = $region48
      $region47: #{residual_group_forward.1} parent=11 // pred_region
        _
      $region48: #{residual_group_forward.1} parent=11 // pred_fallthru
        _
      // Predicated region
      $region49: #{residual_group_forward.1} parent=11 // pred_check
        %p321 = pneg %p253
      $region50: #{residual_group_forward.1} parent=11 // pred_check_branch
        %323 = sbr.rel (%p321) target = $region52
      $region51: #{residual_group_forward.1} parent=11 // pred_region
        _
      $region52: #{residual_group_forward.1} parent=11 // pred_fallthru
        _
    $region12: #{residual_group_forward.1} parent=5 // pred_fallthru
      _
    %p324 = scmp.lt.s32.totalorder %s17, 2
    // Predicated region
    $region53: #{residual_group_forward.1} parent=5 // pred_check
      %p325 = pneg %p324
    $region54: #{residual_group_forward.1} parent=5 // pred_check_branch
      %327 = sbr.rel (%p325) target = $region56
    $region55: #{residual_group_forward.1} parent=5 // pred_region
      // Predicated region
      $region57: #{residual_group_forward.1} parent=55 // pred_check
        %p328 = pneg %p37
      $region58: #{residual_group_forward.1} parent=55 // pred_check_branch
        %330 = sbr.rel (%p328) target = $region60
      $region59: #{residual_group_forward.1} parent=55 // pred_region
        %p331 = scmp.lt.s32.totalorder %s17, 1
        %s332 = scalar_select %p331, %s17, 1
        %s333 = smul.addr %s332, 4
        %s334 = smul.addr %s333, 8
        %s335 = scalar_lea.vmem %s0, %s334
      $region60: #{residual_group_forward.1} parent=55 // pred_fallthru
        _
    $region56: #{residual_group_forward.1} parent=5 // pred_fallthru
      _
    %p336 = scmp.le.s32.totalorder 1, %s17
    %p337 = scmp.lt.s32.totalorder %s17, 3
    %p338 = pnand %p336, %p337
    %p339 = pneg %p338
    // Predicated region
    $region61: #{residual_group_forward.1} parent=5 // pred_check
      _
    $region62: #{residual_group_forward.1} parent=5 // pred_check_branch
      %341 = sbr.rel (%p338) target = $region64
    $region63: #{residual_group_forward.1} parent=5 // pred_region
      %s342 = ssub.s32 %s17, 1
      %p343 = scmp.lt.s32.totalorder %s22, 1
      %s344 = scalar_select %p343, %s22, 1
      %s345 = smul.addr %s344, 4
      %s346 = smul.addr %s345, 8
      %s347 = scalar_lea.vmem %s0, %s346
      %p348 = pneg %p43
      %p349 = pneg %p40
      %p350 = pneg %p64
      %p351 = pneg %p61
      %p352 = pneg %p85
      %p353 = pneg %p82
      %p354 = pneg %p106
      %p355 = pneg %p103
      %p356 = pneg %p127
      %p357 = pneg %p124
      %p358 = pneg %p148
      %p359 = pneg %p145
      %p360 = pneg %p169
      %p361 = pneg %p166
      %p362 = pneg %p190
      %p363 = pneg %p187
      %p364 = pneg %p211
      %p365 = pneg %p208
      %p366 = pneg %p232
      %p367 = pneg %p229
      %p368 = pneg %p253
      %p369 = pneg %p250
      %p370 = pneg %p279
      %p371 = pneg %p276
      %p372 = scmp.lt.s32.totalorder %s22, 1
      %s373 = scalar_select %p372, %s22, 1
      %s374 = smul.addr %s373, 4
      %s375 = smul.addr %s374, 8
      %s376 = scalar_lea.vmem %s11, %s375
      %p377 = scmp.lt.s32.totalorder %s22, 1
      %s378 = scalar_select %p377, %s22, 1
      %s379 = smul.addr %s378, 4
      %s380 = smul.addr %s379, 8
      %s381 = scalar_lea.vmem %s0, %s380
      %p382 = scmp.lt.s32.totalorder %s22, 1
      %s383 = scalar_select %p382, %s22, 1
      %s384 = smul.addr %s383, 4
      %s385 = smul.addr %s384, 8
      %s386 = scalar_lea.vmem %s11, %s385
      %v387 = vlaneseq
      %v388 = vand.u32 %v387, 127
      %v389 = vadd.s32 %v388, 128
      %vm390 = vcmp.lt.s32.totalorder %v388, 0
      %v391 = vsub.s32 0, %v388
      %v392 = vsel %vm390, %v391, %v388
      %v393 = vshrl.u32 %v392, 4
      %v394 = vand.u32 %v392, 15
      %v395 = vsub.s32 0, %v394
      %v396 = vsel %vm390, %v395, %v394
      %vm397 = vcmp.lt.s32.totalorder %v389, 0
      %v398 = vsub.s32 0, %v389
      %v399 = vsel %vm397, %v398, %v389
      %v400 = vshrl.u32 %v399, 4
      %v401 = vand.u32 %v399, 15
      %v402 = vsub.s32 0, %v401
      %v403 = vsel %vm397, %v402, %v401
      %vm404 = vcmp.ne.s32.totalorder %v396, 0
      %vm405 = vcmp.ne.s32.totalorder %v403, 0
      %vm406 = vcmp.lt.s32.totalorder %v396, 0
      %vm407 = vcmp.lt.s32.totalorder %v403, 0
      %vm408 = vmand %vm406, %vm404
      %vm409 = vmand %vm407, %vm405
      %v410 = vadd.s32 %v396, 16
      %v411 = vadd.s32 %v403, 16
      %v412 = vsel %vm408, %v410, %v396
      %v413 = vsel %vm409, %v411, %v403
      %vm414 = vcmp.ge.s32.totalorder %v412, 1
      %vm415 = vcmp.ge.s32.totalorder %v413, 1
      %v416 = vsel %vm414, 1, 0
      %v417 = vsel %vm415, 1, 0
      %v418 = vcvt.s32.f32 %v416
      %v419 = vcvt.s32.f32 %v417
      %vm420 = vcmp.le.s32.totalorder %v412, 14
      %vm421 = vcmp.le.s32.totalorder %v413, 14
      %v422 = vsel %vm420, 1, 0
      %v423 = vsel %vm421, 1, 0
      %v424 = vcvt.s32.f32 %v422
      %v425 = vcvt.s32.f32 %v423
      %v426 = vld [vmem:[%s381] sm:$0xff]
      %v427 = vld [vmem:[%s381 + $0x8] sm:$0xff]
      %v428 = vld [vmem:[%s381 + $0x10] sm:$0xff]
      %v429 = vld [vmem:[%s381 + $0x18] sm:$0xff]
      %v430 = vld [vmem:[%s1] sm:$0xff]
      %v431 = vld [vmem:[%s1 + $0x8] sm:$0xff]
      %v432 = vld [vmem:[%s1 + $0x10] sm:$0xff]
      %v433 = vld [vmem:[%s1 + $0x18] sm:$0xff]
      %v434 = vld [vmem:[%s2] sm:$0xff]
      %v435 = vld [vmem:[%s2 + $0x8] sm:$0xff]
      %440 = vrot.lane.b32.xlu0 %v426, 17
      %v441 = vpop.permute.xlu0 %440
      %442 = vrot.lane.b32.xlu0 %v427, 17
      %v443 = vpop.permute.xlu0 %442
      %444 = vrot.lane.b32.xlu0 %v428, 17
      %v445 = vpop.permute.xlu0 %444
      %446 = vrot.lane.b32.xlu0 %v429, 17
      %v447 = vpop.permute.xlu0 %446
      %vm448 = vcmask 138240
      %v449 = vsel %vm448, %v441, %v443
      %v450 = vsel %vm448, %v445, %v447
      %v457 = vsel %vm448, 0.0, %v441
      %v458 = vsel %vm448, 0.0, %v445
      %v459 = vsel %vm448, %v443, 0.0
      %v460 = vsel %vm448, %v447, 0.0
      %v461 = vmul.f32 %v457, %v418
      %v462 = vmul.f32 %v449, %v419
      %v463 = vmul.f32 %v458, %v418
      %v464 = vmul.f32 %v450, %v419
      %467 = vrot.lane.b32.xlu0 %v424, 2
      %v468 = vpop.permute.xlu0 %467
      %469 = vrot.lane.b32.xlu0 %v425, 2
      %v470 = vpop.permute.xlu0 %469
      %vm471 = vcmask 15360
      %v472 = vsel %vm471, %v468, %v470
      %v476 = vmul.f32 %v457, %v468
      %v477 = vmul.f32 %v449, %v472
      %v478 = vmul.f32 %v459, %v470
      %v479 = vmul.f32 %v458, %v468
      %v480 = vmul.f32 %v450, %v472
      %v481 = vmul.f32 %v460, %v470
      %484 = vrot.lane.b32.xlu0 %v418, 16
      %v485 = vpop.permute.xlu0 %484
      %486 = vrot.lane.b32.xlu0 %v419, 16
      %v487 = vpop.permute.xlu0 %486
      %vm488 = vcmask 130048
      %v489 = vsel %vm488, %v485, %v487
      %v493 = vmul.f32 %v457, %v485
      %v494 = vmul.f32 %v449, %v489
      %v495 = vmul.f32 %v459, %v487
      %v496 = vmul.f32 %v458, %v485
      %v497 = vmul.f32 %v450, %v489
      %v498 = vmul.f32 %v460, %v487
      %499 = vrot.lane.b32.xlu0 %v424, 18
      %v500 = vpop.permute.xlu0 %499
      %501 = vrot.lane.b32.xlu0 %v425, 18
      %v502 = vpop.permute.xlu0 %501
      %vm503 = vcmask 146432
      %v504 = vsel %vm503, %v500, %v502
      %v508 = vmul.f32 %v457, %v500
      %v509 = vmul.f32 %v449, %v504
      %v510 = vmul.f32 %v459, %v502
      %v511 = vmul.f32 %v458, %v500
      %v512 = vmul.f32 %v450, %v504
      %v513 = vmul.f32 %v460, %v502
      %514 = vrot.lane.b32.xlu0 %v418, 32
      %v515 = vpop.permute.xlu0 %514
      %516 = vrot.lane.b32.xlu0 %v419, 32
      %v517 = vpop.permute.xlu0 %516
      %vm518 = vcmask 261120
      %v519 = vsel %vm518, %v515, %v517
      %v523 = vmul.f32 %v457, %v515
      %v524 = vmul.f32 %v449, %v519
      %v525 = vmul.f32 %v459, %v517
      %v526 = vmul.f32 %v458, %v515
      %v527 = vmul.f32 %v450, %v519
      %v528 = vmul.f32 %v460, %v517
      %529 = vrot.lane.b32.xlu0 %v424, 34
      %v530 = vpop.permute.xlu0 %529
      %531 = vrot.lane.b32.xlu0 %v425, 34
      %v532 = vpop.permute.xlu0 %531
      %vm533 = vcmask 277504
      %v534 = vsel %vm533, %v530, %v532
      %v538 = vmul.f32 %v457, %v530
      %v539 = vmul.f32 %v449, %v534
      %v540 = vmul.f32 %v459, %v532
      %v541 = vmul.f32 %v458, %v530
      %v542 = vmul.f32 %v450, %v534
      %v543 = vmul.f32 %v460, %v532
      %548 = vrot.lane.b32.xlu0 %v457, 127
      %v549 = vpop.permute.xlu0 %548
      %550 = vrot.lane.b32.xlu0 %v449, 127
      %v551 = vpop.permute.xlu0 %550
      %552 = vrot.lane.b32.xlu0 %v459, 127
      %v553 = vpop.permute.xlu0 %552
      %554 = vrot.lane.b32.xlu0 %v458, 127
      %v555 = vpop.permute.xlu0 %554
      %556 = vrot.lane.b32.xlu0 %v450, 127
      %v557 = vpop.permute.xlu0 %556
      %558 = vrot.lane.b32.xlu0 %v460, 127
      %v559 = vpop.permute.xlu0 %558
      %vm560 = vcmask 1039360
      %v561 = vsel %vm560, %v549, %v551
      %v562 = vsel %vm560, %v551, %v553
      %v563 = vsel %vm560, %v555, %v557
      %v564 = vsel %vm560, %v557, %v559
      %575 = vrot.lane.b32.xlu0 %v476, 126
      %v576 = vpop.permute.xlu0 %575
      %577 = vrot.lane.b32.xlu0 %v477, 126
      %v578 = vpop.permute.xlu0 %577
      %579 = vrot.lane.b32.xlu0 %v478, 126
      %v580 = vpop.permute.xlu0 %579
      %581 = vrot.lane.b32.xlu0 %v479, 126
      %v582 = vpop.permute.xlu0 %581
      %583 = vrot.lane.b32.xlu0 %v480, 126
      %v584 = vpop.permute.xlu0 %583
      %585 = vrot.lane.b32.xlu0 %v481, 126
      %v586 = vpop.permute.xlu0 %585
      %vm587 = vcmask 1031168
      %v588 = vsel %vm587, %v576, %v578
      %v589 = vsel %vm587, %v578, %v580
      %v590 = vsel %vm587, %v582, %v584
      %v591 = vsel %vm587, %v584, %v586
      %602 = vrot.lane.b32.xlu0 %v493, 112
      %v603 = vpop.permute.xlu0 %602
      %604 = vrot.lane.b32.xlu0 %v494, 112
      %v605 = vpop.permute.xlu0 %604
      %606 = vrot.lane.b32.xlu0 %v495, 112
      %v607 = vpop.permute.xlu0 %606
      %608 = vrot.lane.b32.xlu0 %v496, 112
      %v609 = vpop.permute.xlu0 %608
      %610 = vrot.lane.b32.xlu0 %v497, 112
      %v611 = vpop.permute.xlu0 %610
      %612 = vrot.lane.b32.xlu0 %v498, 112
      %v613 = vpop.permute.xlu0 %612
      %vm614 = vcmask 916480
      %v615 = vsel %vm614, %v603, %v605
      %v616 = vsel %vm614, %v605, %v607
      %v617 = vsel %vm614, %v609, %v611
      %v618 = vsel %vm614, %v611, %v613
      %623 = vrot.lane.b32.xlu0 %v457, 111
      %v624 = vpop.permute.xlu0 %623
      %625 = vrot.lane.b32.xlu0 %v449, 111
      %v626 = vpop.permute.xlu0 %625
      %627 = vrot.lane.b32.xlu0 %v459, 111
      %v628 = vpop.permute.xlu0 %627
      %629 = vrot.lane.b32.xlu0 %v458, 111
      %v630 = vpop.permute.xlu0 %629
      %631 = vrot.lane.b32.xlu0 %v450, 111
      %v632 = vpop.permute.xlu0 %631
      %633 = vrot.lane.b32.xlu0 %v460, 111
      %v634 = vpop.permute.xlu0 %633
      %vm635 = vcmask 908288
      %v636 = vsel %vm635, %v624, %v626
      %v637 = vsel %vm635, %v626, %v628
      %v638 = vsel %vm635, %v630, %v632
      %v639 = vsel %vm635, %v632, %v634
      %650 = vrot.lane.b32.xlu0 %v508, 110
      %v651 = vpop.permute.xlu0 %650
      %652 = vrot.lane.b32.xlu0 %v509, 110
      %v653 = vpop.permute.xlu0 %652
      %654 = vrot.lane.b32.xlu0 %v510, 110
      %v655 = vpop.permute.xlu0 %654
      %656 = vrot.lane.b32.xlu0 %v511, 110
      %v657 = vpop.permute.xlu0 %656
      %658 = vrot.lane.b32.xlu0 %v512, 110
      %v659 = vpop.permute.xlu0 %658
      %660 = vrot.lane.b32.xlu0 %v513, 110
      %v661 = vpop.permute.xlu0 %660
      %vm662 = vcmask 900096
      %v663 = vsel %vm662, %v651, %v653
      %v664 = vsel %vm662, %v653, %v655
      %v665 = vsel %vm662, %v657, %v659
      %v666 = vsel %vm662, %v659, %v661
      %677 = vrot.lane.b32.xlu0 %v523, 96
      %v678 = vpop.permute.xlu0 %677
      %679 = vrot.lane.b32.xlu0 %v524, 96
      %v680 = vpop.permute.xlu0 %679
      %681 = vrot.lane.b32.xlu0 %v525, 96
      %v682 = vpop.permute.xlu0 %681
      %683 = vrot.lane.b32.xlu0 %v526, 96
      %v684 = vpop.permute.xlu0 %683
      %685 = vrot.lane.b32.xlu0 %v527, 96
      %v686 = vpop.permute.xlu0 %685
      %687 = vrot.lane.b32.xlu0 %v528, 96
      %v688 = vpop.permute.xlu0 %687
      %vm689 = vcmask 785408
      %v690 = vsel %vm689, %v678, %v680
      %v691 = vsel %vm689, %v680, %v682
      %v692 = vsel %vm689, %v684, %v686
      %v693 = vsel %vm689, %v686, %v688
      %698 = vrot.lane.b32.xlu0 %v457, 95
      %v699 = vpop.permute.xlu0 %698
      %700 = vrot.lane.b32.xlu0 %v449, 95
      %v701 = vpop.permute.xlu0 %700
      %702 = vrot.lane.b32.xlu0 %v459, 95
      %v703 = vpop.permute.xlu0 %702
      %704 = vrot.lane.b32.xlu0 %v458, 95
      %v705 = vpop.permute.xlu0 %704
      %706 = vrot.lane.b32.xlu0 %v450, 95
      %v707 = vpop.permute.xlu0 %706
      %708 = vrot.lane.b32.xlu0 %v460, 95
      %v709 = vpop.permute.xlu0 %708
      %vm710 = vcmask 777216
      %v711 = vsel %vm710, %v699, %v701
      %v712 = vsel %vm710, %v701, %v703
      %v713 = vsel %vm710, %v705, %v707
      %v714 = vsel %vm710, %v707, %v709
      %725 = vrot.lane.b32.xlu0 %v538, 94
      %v726 = vpop.permute.xlu0 %725
      %727 = vrot.lane.b32.xlu0 %v539, 94
      %v728 = vpop.permute.xlu0 %727
      %729 = vrot.lane.b32.xlu0 %v540, 94
      %v730 = vpop.permute.xlu0 %729
      %731 = vrot.lane.b32.xlu0 %v541, 94
      %v732 = vpop.permute.xlu0 %731
      %733 = vrot.lane.b32.xlu0 %v542, 94
      %v734 = vpop.permute.xlu0 %733
      %735 = vrot.lane.b32.xlu0 %v543, 94
      %v736 = vpop.permute.xlu0 %735
      %vm737 = vcmask 769024
      %v738 = vsel %vm737, %v726, %v728
      %v739 = vsel %vm737, %v728, %v730
      %v740 = vsel %vm737, %v732, %v734
      %v741 = vsel %vm737, %v734, %v736
      %747 = vset.pattern.permute.xlu0 0
      %748 = vperm.xlu0 %747, %v434
      %v749 = vpop.permute.xlu0 %748
      %752 = vset.pattern.permute.xlu0 0
      %753 = vperm.xlu0 %752, %v435
      %v754 = vpop.permute.xlu0 %753
      %v757 = vsel %vm488, %v431, 0
      %v760 = vsel %vm488, %v433, 0
      %762 = vmatprep.subr.mxu0 %v714
      %763 = vmatpush1.msra.mxu0 %v713
      %764 = vmatprep.subr.mxu0 %v712
      %765 = vmatpush1.msra.mxu0 %v711
      %766 = vmatprep.subr.mxu0 %v693
      %767 = vmatpush1.msra.mxu0 %v692
      %768 = vmatprep.subr.mxu0 %v691
      %769 = vmatpush1.msra.mxu0 %v690
      %770 = vmatprep.subr.mxu0 %v666
      %771 = vmatpush1.msra.mxu0 %v665
      %772 = vmatprep.subr.mxu0 %v664
      %773 = vmatpush1.msra.mxu0 %v663
      %774 = vmatprep.subr.mxu0 %v639
      %775 = vmatpush1.msra.mxu0 %v638
      %776 = vmatprep.subr.mxu0 %v637
      %777 = vmatpush1.msra.mxu0 %v636
      %778 = vmatprep.subr.mxu0 %v618
      %779 = vmatpush1.msra.mxu0 %v617
      %780 = vmatprep.subr.mxu0 %v616
      %781 = vmatpush1.msra.mxu0 %v615
      %782 = vmatprep.subr.mxu0 %v591
      %783 = vmatpush1.msra.mxu0 %v590
      %784 = vmatprep.subr.mxu0 %v589
      %785 = vmatpush1.msra.mxu0 %v588
      %786 = vmatprep.subr.mxu0 %v564
      %787 = vmatpush1.msra.mxu0 %v563
      %788 = vmatprep.subr.mxu0 %v562
      %789 = vmatpush1.msra.mxu0 %v561
      %790 = vmatprep.subr.mxu0 %v464
      %791 = vmatpush1.msra.mxu0 %v463
      %792 = vmatprep.subr.mxu0 %v462
      %793 = vmatpush1.msra.mxu0 %v461
      %794 = vmatprep.subr.mxu0 0.0
      %795 = vmatpush2.msra.mxu0 0.0
      %796 = vmatprep.subr.mxu0 0.0
      %797 = vmatpush2.msra.mxu0 0.0
      %798 = vmatprep.subr.mxu0 0.0
      %799 = vmatpush2.msra.mxu0 0.0
      %800 = vmatprep.subr.mxu0 0.0
      %801 = vmatpush2.msra.mxu0 0.0
      %802 = vmatprep.subr.mxu0 0.0
      %803 = vmatpush2.msra.mxu0 0.0
      %804 = vmatprep.subr.mxu0 0.0
      %805 = vmatpush2.msra.mxu0 0.0
      %806 = vmatprep.subr.mxu0 0.0
      %807 = vmatpush2.msra.mxu0 0.0
      %808 = vmatprep.subr.mxu0 0.0
      %809 = vmatpush2.msra.mxu0 0.0
      %810 = vmatprep.subr.mxu0 0.0
      %811 = vmatpush2.msra.mxu0 0.0
      %812 = vmatprep.subr.mxu0 0.0
      %813 = vmatpush2.msra.mxu0 0.0
      %814 = vmatprep.subr.mxu0 0.0
      %815 = vmatpush2.msra.mxu0 0.0
      %816 = vmatprep.subr.mxu0 0.0
      %817 = vmatpush2.msra.mxu0 0.0
      %818 = vmatprep.subr.mxu0 0.0
      %819 = vmatpush2.msra.mxu0 0.0
      %820 = vmatprep.subr.mxu0 0.0
      %821 = vmatpush2.msra.mxu0 0.0
      %822 = vmatprep.subr.mxu0 %v741
      %823 = vmatpush2.msra.mxu0 %v740
      %824 = vmatprep.subr.mxu0 %v739
      %825 = vmatpush2.msra.mxu0 %v738
      %826 = vmatprep.mubr.f32.mxu0 %v757
      %827 = vmatmul.mubr.f32.gmra.mxu0 %v430
      %v828 = vpop.f32.mrf.mxu0
      %v829 = vadd.f32 %v749, %v828
      %v830 = vpop.f32.mrf.mxu0
      %v831 = vadd.f32 %v749, %v830
      %832 = vmatprep.mubr.f32.mxu0 %v760
      %833 = vmatmul.mubr.f32.gmra.mxu0 %v432
      %v834 = vpop.f32.mrf.mxu0
      %v835 = vadd.f32 %v754, %v834
      %v836 = vpop.f32.mrf.mxu0
      %v837 = vadd.f32 %v754, %v836
      %838 = vdwg.mxu0
      %v839 = vmax.f32 %v829, 0.0
      %v840 = vmax.f32 %v831, 0.0
      %v841 = vmax.f32 %v835, 0.0
      %v842 = vmax.f32 %v837, 0.0
      %v843 = vld [vmem:[%s3] sm:$0xff]
      %v844 = vld [vmem:[%s3 + $0x8] sm:$0xff]
      %v845 = vld [vmem:[%s3 + $0x10] sm:$0xff]
      %v846 = vld [vmem:[%s3 + $0x18] sm:$0xff]
      %v847 = vld [vmem:[%s4] sm:$0xff]
      %v848 = vld [vmem:[%s4 + $0x8] sm:$0xff]
      %853 = vrot.lane.b32.xlu0 %v839, 17
      %v854 = vpop.permute.xlu0 %853
      %855 = vrot.lane.b32.xlu0 %v840, 17
      %v856 = vpop.permute.xlu0 %855
      %857 = vrot.lane.b32.xlu0 %v841, 17
      %v858 = vpop.permute.xlu0 %857
      %859 = vrot.lane.b32.xlu0 %v842, 17
      %v860 = vpop.permute.xlu0 %859
      %v861 = vsel %vm448, %v854, %v856
      %v862 = vsel %vm448, %v858, %v860
      %v869 = vsel %vm448, 0.0, %v854
      %v870 = vsel %vm448, 0.0, %v858
      %v871 = vsel %vm448, %v856, 0.0
      %v872 = vsel %vm448, %v860, 0.0
      %v873 = vmul.f32 %v869, %v418
      %v874 = vmul.f32 %v861, %v419
      %v875 = vmul.f32 %v870, %v418
      %v876 = vmul.f32 %v862, %v419
      %v877 = vmul.f32 %v869, %v468
      %v878 = vmul.f32 %v861, %v472
      %v879 = vmul.f32 %v871, %v470
      %v880 = vmul.f32 %v870, %v468
      %v881 = vmul.f32 %v862, %v472
      %v882 = vmul.f32 %v872, %v470
      %v883 = vmul.f32 %v869, %v485
      %v884 = vmul.f32 %v861, %v489
      %v885 = vmul.f32 %v871, %v487
      %v886 = vmul.f32 %v870, %v485
      %v887 = vmul.f32 %v862, %v489
      %v888 = vmul.f32 %v872, %v487
      %v889 = vmul.f32 %v869, %v500
      %v890 = vmul.f32 %v861, %v504
      %v891 = vmul.f32 %v871, %v502
      %v892 = vmul.f32 %v870, %v500
      %v893 = vmul.f32 %v862, %v504
      %v894 = vmul.f32 %v872, %v502
      %v895 = vmul.f32 %v869, %v515
      %v896 = vmul.f32 %v861, %v519
      %v897 = vmul.f32 %v871, %v517
      %v898 = vmul.f32 %v870, %v515
      %v899 = vmul.f32 %v862, %v519
      %v900 = vmul.f32 %v872, %v517
      %v901 = vmul.f32 %v869, %v530
      %v902 = vmul.f32 %v861, %v534
      %v903 = vmul.f32 %v871, %v532
      %v904 = vmul.f32 %v870, %v530
      %v905 = vmul.f32 %v862, %v534
      %v906 = vmul.f32 %v872, %v532
      %911 = vrot.lane.b32.xlu0 %v869, 127
      %v912 = vpop.permute.xlu0 %911
      %913 = vrot.lane.b32.xlu0 %v861, 127
      %v914 = vpop.permute.xlu0 %913
      %915 = vrot.lane.b32.xlu0 %v871, 127
      %v916 = vpop.permute.xlu0 %915
      %917 = vrot.lane.b32.xlu0 %v870, 127
      %v918 = vpop.permute.xlu0 %917
      %919 = vrot.lane.b32.xlu0 %v862, 127
      %v920 = vpop.permute.xlu0 %919
      %921 = vrot.lane.b32.xlu0 %v872, 127
      %v922 = vpop.permute.xlu0 %921
      %v923 = vsel %vm560, %v912, %v914
      %v924 = vsel %vm560, %v914, %v916
      %v925 = vsel %vm560, %v918, %v920
      %v926 = vsel %vm560, %v920, %v922
      %937 = vrot.lane.b32.xlu0 %v877, 126
      %v938 = vpop.permute.xlu0 %937
      %939 = vrot.lane.b32.xlu0 %v878, 126
      %v940 = vpop.permute.xlu0 %939
      %941 = vrot.lane.b32.xlu0 %v879, 126
      %v942 = vpop.permute.xlu0 %941
      %943 = vrot.lane.b32.xlu0 %v880, 126
      %v944 = vpop.permute.xlu0 %943
      %945 = vrot.lane.b32.xlu0 %v881, 126
      %v946 = vpop.permute.xlu0 %945
      %947 = vrot.lane.b32.xlu0 %v882, 126
      %v948 = vpop.permute.xlu0 %947
      %v949 = vsel %vm587, %v938, %v940
      %v950 = vsel %vm587, %v940, %v942
      %v951 = vsel %vm587, %v944, %v946
      %v952 = vsel %vm587, %v946, %v948
      %963 = vrot.lane.b32.xlu0 %v883, 112
      %v964 = vpop.permute.xlu0 %963
      %965 = vrot.lane.b32.xlu0 %v884, 112
      %v966 = vpop.permute.xlu0 %965
      %967 = vrot.lane.b32.xlu0 %v885, 112
      %v968 = vpop.permute.xlu0 %967
      %969 = vrot.lane.b32.xlu0 %v886, 112
      %v970 = vpop.permute.xlu0 %969
      %971 = vrot.lane.b32.xlu0 %v887, 112
      %v972 = vpop.permute.xlu0 %971
      %973 = vrot.lane.b32.xlu0 %v888, 112
      %v974 = vpop.permute.xlu0 %973
      %v975 = vsel %vm614, %v964, %v966
      %v976 = vsel %vm614, %v966, %v968
      %v977 = vsel %vm614, %v970, %v972
      %v978 = vsel %vm614, %v972, %v974
      %983 = vrot.lane.b32.xlu0 %v869, 111
      %v984 = vpop.permute.xlu0 %983
      %985 = vrot.lane.b32.xlu0 %v861, 111
      %v986 = vpop.permute.xlu0 %985
      %987 = vrot.lane.b32.xlu0 %v871, 111
      %v988 = vpop.permute.xlu0 %987
      %989 = vrot.lane.b32.xlu0 %v870, 111
      %v990 = vpop.permute.xlu0 %989
      %991 = vrot.lane.b32.xlu0 %v862, 111
      %v992 = vpop.permute.xlu0 %991
      %993 = vrot.lane.b32.xlu0 %v872, 111
      %v994 = vpop.permute.xlu0 %993
      %v995 = vsel %vm635, %v984, %v986
      %v996 = vsel %vm635, %v986, %v988
      %v997 = vsel %vm635, %v990, %v992
      %v998 = vsel %vm635, %v992, %v994
      %1009 = vrot.lane.b32.xlu0 %v889, 110
      %v1010 = vpop.permute.xlu0 %1009
      %1011 = vrot.lane.b32.xlu0 %v890, 110
      %v1012 = vpop.permute.xlu0 %1011
      %1013 = vrot.lane.b32.xlu0 %v891, 110
      %v1014 = vpop.permute.xlu0 %1013
      %1015 = vrot.lane.b32.xlu0 %v892, 110
      %v1016 = vpop.permute.xlu0 %1015
      %1017 = vrot.lane.b32.xlu0 %v893, 110
      %v1018 = vpop.permute.xlu0 %1017
      %1019 = vrot.lane.b32.xlu0 %v894, 110
      %v1020 = vpop.permute.xlu0 %1019
      %v1021 = vsel %vm662, %v1010, %v1012
      %v1022 = vsel %vm662, %v1012, %v1014
      %v1023 = vsel %vm662, %v1016, %v1018
      %v1024 = vsel %vm662, %v1018, %v1020
      %1035 = vrot.lane.b32.xlu0 %v895, 96
      %v1036 = vpop.permute.xlu0 %1035
      %1037 = vrot.lane.b32.xlu0 %v896, 96
      %v1038 = vpop.permute.xlu0 %1037
      %1039 = vrot.lane.b32.xlu0 %v897, 96
      %v1040 = vpop.permute.xlu0 %1039
      %1041 = vrot.lane.b32.xlu0 %v898, 96
      %v1042 = vpop.permute.xlu0 %1041
      %1043 = vrot.lane.b32.xlu0 %v899, 96
      %v1044 = vpop.permute.xlu0 %1043
      %1045 = vrot.lane.b32.xlu0 %v900, 96
      %v1046 = vpop.permute.xlu0 %1045
      %v1047 = vsel %vm689, %v1036, %v1038
      %v1048 = vsel %vm689, %v1038, %v1040
      %v1049 = vsel %vm689, %v1042, %v1044
      %v1050 = vsel %vm689, %v1044, %v1046
      %1055 = vrot.lane.b32.xlu0 %v869, 95
      %v1056 = vpop.permute.xlu0 %1055
      %1057 = vrot.lane.b32.xlu0 %v861, 95
      %v1058 = vpop.permute.xlu0 %1057
      %1059 = vrot.lane.b32.xlu0 %v871, 95
      %v1060 = vpop.permute.xlu0 %1059
      %1061 = vrot.lane.b32.xlu0 %v870, 95
      %v1062 = vpop.permute.xlu0 %1061
      %1063 = vrot.lane.b32.xlu0 %v862, 95
      %v1064 = vpop.permute.xlu0 %1063
      %1065 = vrot.lane.b32.xlu0 %v872, 95
      %v1066 = vpop.permute.xlu0 %1065
      %v1067 = vsel %vm710, %v1056, %v1058
      %v1068 = vsel %vm710, %v1058, %v1060
      %v1069 = vsel %vm710, %v1062, %v1064
      %v1070 = vsel %vm710, %v1064, %v1066
      %1081 = vrot.lane.b32.xlu0 %v901, 94
      %v1082 = vpop.permute.xlu0 %1081
      %1083 = vrot.lane.b32.xlu0 %v902, 94
      %v1084 = vpop.permute.xlu0 %1083
      %1085 = vrot.lane.b32.xlu0 %v903, 94
      %v1086 = vpop.permute.xlu0 %1085
      %1087 = vrot.lane.b32.xlu0 %v904, 94
      %v1088 = vpop.permute.xlu0 %1087
      %1089 = vrot.lane.b32.xlu0 %v905, 94
      %v1090 = vpop.permute.xlu0 %1089
      %1091 = vrot.lane.b32.xlu0 %v906, 94
      %v1092 = vpop.permute.xlu0 %1091
      %v1093 = vsel %vm737, %v1082, %v1084
      %v1094 = vsel %vm737, %v1084, %v1086
      %v1095 = vsel %vm737, %v1088, %v1090
      %v1096 = vsel %vm737, %v1090, %v1092
      %1102 = vset.pattern.permute.xlu0 0
      %1103 = vperm.xlu0 %1102, %v847
      %v1104 = vpop.permute.xlu0 %1103
      %1107 = vset.pattern.permute.xlu0 0
      %1108 = vperm.xlu0 %1107, %v848
      %v1109 = vpop.permute.xlu0 %1108
      %v1112 = vsel %vm488, %v844, 0
      %v1115 = vsel %vm488, %v846, 0
      %1117 = vmatprep.subr.mxu0 %v1070
      %1118 = vmatpush1.msra.mxu0 %v1069
      %1119 = vmatprep.subr.mxu0 %v1068
      %1120 = vmatpush1.msra.mxu0 %v1067
      %1121 = vmatprep.subr.mxu0 %v1050
      %1122 = vmatpush1.msra.mxu0 %v1049
      %1123 = vmatprep.subr.mxu0 %v1048
      %1124 = vmatpush1.msra.mxu0 %v1047
      %1125 = vmatprep.subr.mxu0 %v1024
      %1126 = vmatpush1.msra.mxu0 %v1023
      %1127 = vmatprep.subr.mxu0 %v1022
      %1128 = vmatpush1.msra.mxu0 %v1021
      %1129 = vmatprep.subr.mxu0 %v998
      %1130 = vmatpush1.msra.mxu0 %v997
      %1131 = vmatprep.subr.mxu0 %v996
      %1132 = vmatpush1.msra.mxu0 %v995
      %1133 = vmatprep.subr.mxu0 %v978
      %1134 = vmatpush1.msra.mxu0 %v977
      %1135 = vmatprep.subr.mxu0 %v976
      %1136 = vmatpush1.msra.mxu0 %v975
      %1137 = vmatprep.subr.mxu0 %v952
      %1138 = vmatpush1.msra.mxu0 %v951
      %1139 = vmatprep.subr.mxu0 %v950
      %1140 = vmatpush1.msra.mxu0 %v949
      %1141 = vmatprep.subr.mxu0 %v926
      %1142 = vmatpush1.msra.mxu0 %v925
      %1143 = vmatprep.subr.mxu0 %v924
      %1144 = vmatpush1.msra.mxu0 %v923
      %1145 = vmatprep.subr.mxu0 %v876
      %1146 = vmatpush1.msra.mxu0 %v875
      %1147 = vmatprep.subr.mxu0 %v874
      %1148 = vmatpush1.msra.mxu0 %v873
      %1149 = vmatprep.subr.mxu0 0.0
      %1150 = vmatpush2.msra.mxu0 0.0
      %1151 = vmatprep.subr.mxu0 0.0
      %1152 = vmatpush2.msra.mxu0 0.0
      %1153 = vmatprep.subr.mxu0 0.0
      %1154 = vmatpush2.msra.mxu0 0.0
      %1155 = vmatprep.subr.mxu0 0.0
      %1156 = vmatpush2.msra.mxu0 0.0
      %1157 = vmatprep.subr.mxu0 0.0
      %1158 = vmatpush2.msra.mxu0 0.0
      %1159 = vmatprep.subr.mxu0 0.0
      %1160 = vmatpush2.msra.mxu0 0.0
      %1161 = vmatprep.subr.mxu0 0.0
      %1162 = vmatpush2.msra.mxu0 0.0
      %1163 = vmatprep.subr.mxu0 0.0
      %1164 = vmatpush2.msra.mxu0 0.0
      %1165 = vmatprep.subr.mxu0 0.0
      %1166 = vmatpush2.msra.mxu0 0.0
      %1167 = vmatprep.subr.mxu0 0.0
      %1168 = vmatpush2.msra.mxu0 0.0
      %1169 = vmatprep.subr.mxu0 0.0
      %1170 = vmatpush2.msra.mxu0 0.0
      %1171 = vmatprep.subr.mxu0 0.0
      %1172 = vmatpush2.msra.mxu0 0.0
      %1173 = vmatprep.subr.mxu0 0.0
      %1174 = vmatpush2.msra.mxu0 0.0
      %1175 = vmatprep.subr.mxu0 0.0
      %1176 = vmatpush2.msra.mxu0 0.0
      %1177 = vmatprep.subr.mxu0 %v1096
      %1178 = vmatpush2.msra.mxu0 %v1095
      %1179 = vmatprep.subr.mxu0 %v1094
      %1180 = vmatpush2.msra.mxu0 %v1093
      %1181 = vmatprep.mubr.f32.mxu0 %v1112
      %1182 = vmatmul.mubr.f32.gmra.mxu0 %v843
      %v1183 = vpop.f32.mrf.mxu0
      %v1184 = vadd.f32 %v1104, %v1183
      %v1185 = vpop.f32.mrf.mxu0
      %v1186 = vadd.f32 %v1104, %v1185
      %1187 = vmatprep.mubr.f32.mxu0 %v1115
      %1188 = vmatmul.mubr.f32.gmra.mxu0 %v845
      %v1189 = vpop.f32.mrf.mxu0
      %v1190 = vadd.f32 %v1109, %v1189
      %v1191 = vpop.f32.mrf.mxu0
      %v1192 = vadd.f32 %v1109, %v1191
      %1193 = vdwg.mxu0
      %v1194 = vadd.f32 %v1184, %v1186
      %1195 = vadd.xlane.f32.xlu0 %v1194
      %v1196 = vpop.xlane.xlu0 %1195
      %v1197 = vadd.f32 %v1190, %v1192
      %1198 = vadd.xlane.f32.xlu0 %v1197
      %v1199 = vpop.xlane.xlu0 %1198
      %v1200 = vmul.f32 %v1196, 0.00390625
      %v1201 = vmul.f32 %v1199, 0.00390625
      %v1202 = vld [vmem:[%s5] sm:$0xf]
      %v1203 = vld [vmem:[%s6] sm:$0xf]
      %v1205 = vsel %vm488, %v1202, 0
      %1207 = vmatprep.subr.mxu0 0.0
      %1208 = vmatpush1.msra.mxu0 0.0
      %1209 = vmatprep.subr.mxu0 0.0
      %1210 = vmatpush1.msra.mxu0 0.0
      %1211 = vmatprep.subr.mxu0 0.0
      %1212 = vmatpush1.msra.mxu0 0.0
      %1213 = vmatprep.subr.mxu0 0.0
      %1214 = vmatpush1.msra.mxu0 0.0
      %1215 = vmatprep.subr.mxu0 0.0
      %1216 = vmatpush1.msra.mxu0 0.0
      %1217 = vmatprep.subr.mxu0 0.0
      %1218 = vmatpush1.msra.mxu0 0.0
      %1219 = vmatprep.subr.mxu0 0.0
      %1220 = vmatpush1.msra.mxu0 0.0
      %1221 = vmatprep.subr.mxu0 0.0
      %1222 = vmatpush1.msra.mxu0 0.0
      %1223 = vmatprep.subr.mxu0 0.0
      %1224 = vmatpush1.msra.mxu0 0.0
      %1225 = vmatprep.subr.mxu0 0.0
      %1226 = vmatpush1.msra.mxu0 0.0
      %1227 = vmatprep.subr.mxu0 0.0
      %1228 = vmatpush1.msra.mxu0 0.0
      %1229 = vmatprep.subr.mxu0 0.0
      %1230 = vmatpush1.msra.mxu0 0.0
      %1231 = vmatprep.subr.mxu0 0.0
      %1232 = vmatpush1.msra.mxu0 0.0
      %1233 = vmatprep.subr.mxu0 0.0
      %1234 = vmatpush1.msra.mxu0 0.0
      %1235 = vmatprep.subr.mxu0 0.0
      %1236 = vmatpush1.msra.mxu0 %v1201
      %1237 = vmatprep.subr.mxu0 0.0
      %1238 = vmatpush1.msra.mxu0 %v1200
      %1239 = vmatprep.subr.mxu0 0.0
      %1240 = vmatpush2.msra.mxu0 0.0
      %1241 = vmatprep.subr.mxu0 0.0
      %1242 = vmatpush2.msra.mxu0 0.0
      %1243 = vmatprep.subr.mxu0 0.0
      %1244 = vmatpush2.msra.mxu0 0.0
      %1245 = vmatprep.subr.mxu0 0.0
      %1246 = vmatpush2.msra.mxu0 0.0
      %1247 = vmatprep.subr.mxu0 0.0
      %1248 = vmatpush2.msra.mxu0 0.0
      %1249 = vmatprep.subr.mxu0 0.0
      %1250 = vmatpush2.msra.mxu0 0.0
      %1251 = vmatprep.subr.mxu0 0.0
      %1252 = vmatpush2.msra.mxu0 0.0
      %1253 = vmatprep.subr.mxu0 0.0
      %1254 = vmatpush2.msra.mxu0 0.0
      %1255 = vmatprep.subr.mxu0 0.0
      %1256 = vmatpush2.msra.mxu0 0.0
      %1257 = vmatprep.subr.mxu0 0.0
      %1258 = vmatpush2.msra.mxu0 0.0
      %1259 = vmatprep.subr.mxu0 0.0
      %1260 = vmatpush2.msra.mxu0 0.0
      %1261 = vmatprep.subr.mxu0 0.0
      %1262 = vmatpush2.msra.mxu0 0.0
      %1263 = vmatprep.subr.mxu0 0.0
      %1264 = vmatpush2.msra.mxu0 0.0
      %1265 = vmatprep.subr.mxu0 0.0
      %1266 = vmatpush2.msra.mxu0 0.0
      %1267 = vmatprep.subr.mxu0 0.0
      %1268 = vmatpush2.msra.mxu0 0.0
      %1269 = vmatprep.subr.mxu0 0.0
      %1270 = vmatpush2.msra.mxu0 0.0
      %1271 = vmatprep.mubr.f32.mxu0 0.0
      %1272 = vmatmul.mubr.f32.gmra.mxu0 %v1205
      %v1273 = vpop.f32.mrf.mxu0
      %v1274 = vadd.f32 %v1203, %v1273
      %v1275 = vpop.f32.mrf.mxu0
      %1276 = vdwg.mxu0
      %v1277 = vmax.f32 %v1274, 0.0
      %v1278 = vld [vmem:[%s7] sm:$0xff]
      %v1279 = vld [vmem:[%s7 + $0x8] sm:$0xff]
      %v1280 = vld [vmem:[%s8] sm:$0xff]
      %v1281 = vld [vmem:[%s8 + $0x8] sm:$0xff]
      %vm1282 = vcmask 31744
      %v1284 = vsel %vm1282, %v1278, 0
      %v1287 = vsel %vm1282, %v1279, 0
      %vm1289 = vcmask 1043456
      %v1291 = vsel %vm1289, %v1277, 0
      %1293 = vmatprep.subr.mxu0 0.0
      %1294 = vmatpush1.msra.mxu0 0.0
      %1295 = vmatprep.subr.mxu0 0.0
      %1296 = vmatpush1.msra.mxu0 0.0
      %1297 = vmatprep.subr.mxu0 0.0
      %1298 = vmatpush1.msra.mxu0 0.0
      %1299 = vmatprep.subr.mxu0 0.0
      %1300 = vmatpush1.msra.mxu0 0.0
      %1301 = vmatprep.subr.mxu0 0.0
      %1302 = vmatpush1.msra.mxu0 0.0
      %1303 = vmatprep.subr.mxu0 0.0
      %1304 = vmatpush1.msra.mxu0 0.0
      %1305 = vmatprep.subr.mxu0 0.0
      %1306 = vmatpush1.msra.mxu0 0.0
      %1307 = vmatprep.subr.mxu0 0.0
      %1308 = vmatpush1.msra.mxu0 0.0
      %1309 = vmatprep.subr.mxu0 0.0
      %1310 = vmatpush1.msra.mxu0 0.0
      %1311 = vmatprep.subr.mxu0 0.0
      %1312 = vmatpush1.msra.mxu0 0.0
      %1313 = vmatprep.subr.mxu0 0.0
      %1314 = vmatpush1.msra.mxu0 0.0
      %1315 = vmatprep.subr.mxu0 0.0
      %1316 = vmatpush1.msra.mxu0 0.0
      %1317 = vmatprep.subr.mxu0 0.0
      %1318 = vmatpush1.msra.mxu0 0.0
      %1319 = vmatprep.subr.mxu0 0.0
      %1320 = vmatpush1.msra.mxu0 0.0
      %1321 = vmatprep.subr.mxu0 0.0
      %1322 = vmatpush1.msra.mxu0 0.0
      %1323 = vmatprep.subr.mxu0 0.0
      %1324 = vmatpush1.msra.mxu0 %v1291
      %1325 = vmatprep.subr.mxu0 0.0
      %1326 = vmatpush2.msra.mxu0 0.0
      %1327 = vmatprep.subr.mxu0 0.0
      %1328 = vmatpush2.msra.mxu0 0.0
      %1329 = vmatprep.subr.mxu0 0.0
      %1330 = vmatpush2.msra.mxu0 0.0
      %1331 = vmatprep.subr.mxu0 0.0
      %1332 = vmatpush2.msra.mxu0 0.0
      %1333 = vmatprep.subr.mxu0 0.0
      %1334 = vmatpush2.msra.mxu0 0.0
      %1335 = vmatprep.subr.mxu0 0.0
      %1336 = vmatpush2.msra.mxu0 0.0
      %1337 = vmatprep.subr.mxu0 0.0
      %1338 = vmatpush2.msra.mxu0 0.0
      %1339 = vmatprep.subr.mxu0 0.0
      %1340 = vmatpush2.msra.mxu0 0.0
      %1341 = vmatprep.subr.mxu0 0.0
      %1342 = vmatpush2.msra.mxu0 0.0
      %1343 = vmatprep.subr.mxu0 0.0
      %1344 = vmatpush2.msra.mxu0 0.0
      %1345 = vmatprep.subr.mxu0 0.0
      %1346 = vmatpush2.msra.mxu0 0.0
      %1347 = vmatprep.subr.mxu0 0.0
      %1348 = vmatpush2.msra.mxu0 0.0
      %1349 = vmatprep.subr.mxu0 0.0
      %1350 = vmatpush2.msra.mxu0 0.0
      %1351 = vmatprep.subr.mxu0 0.0
      %1352 = vmatpush2.msra.mxu0 0.0
      %1353 = vmatprep.subr.mxu0 0.0
      %1354 = vmatpush2.msra.mxu0 0.0
      %1355 = vmatprep.subr.mxu0 0.0
      %1356 = vmatpush2.msra.mxu0 0.0
      %1357 = vmatprep.mubr.f32.mxu0 0.0
      %1358 = vmatmul.mubr.f32.gmra.mxu0 %v1284
      %v1359 = vpop.f32.mrf.mxu0
      %v1360 = vadd.f32 %v1280, %v1359
      %v1361 = vpop.f32.mrf.mxu0
      %1362 = vmatprep.mubr.f32.mxu0 0.0
      %1363 = vmatmul.mubr.f32.gmra.mxu0 %v1287
      %v1364 = vpop.f32.mrf.mxu0
      %v1365 = vadd.f32 %v1281, %v1364
      %v1366 = vpop.f32.mrf.mxu0
      %1367 = vdwg.mxu0
      %v1368 = vxor.u32 %v1360, 2147483648
      %v1369 = vxor.u32 %v1365, 2147483648
      %v1370 = vmul.f32 %v1368, 1.442695
      %v1371 = vpow.pop %v1370
      %v1372 = vmul.f32 %v1369, 1.442695
      %v1373 = vpow.pop %v1372
      %v1374 = vadd.f32 %v1371, 1.0
      %v1375 = vadd.f32 %v1373, 1.0
      %v1376 = vrcp.pop %v1374
      %v1377 = vmul.f32 1.0, %v1376
      %v1378 = vrcp.pop %v1375
      %v1379 = vmul.f32 1.0, %v1378
      %1381 = vset.pattern.permute.xlu0 0
      %1382 = vperm.xlu0 %1381, %v1377
      %v1383 = vpop.permute.xlu0 %1382
      %1386 = vset.pattern.permute.xlu0 0
      %1387 = vperm.xlu0 %1386, %v1379
      %v1388 = vpop.permute.xlu0 %1387
      %v1390 = vmul.f32 %v1184, %v1383
      %v1391 = vmul.f32 %v1186, %v1383
      %v1392 = vmul.f32 %v1190, %v1388
      %v1393 = vmul.f32 %v1192, %v1388
      %v1394 = vadd.f32 %v1390, %v426
      %v1395 = vadd.f32 %v1391, %v427
      %v1396 = vadd.f32 %v1392, %v428
      %v1397 = vadd.f32 %v1393, %v429
      %s1398 = scalar_lea.vmem %s1, 32
      %v1399 = vld [vmem:[%s1398] sm:$0xff]
      %v1400 = vld [vmem:[%s1398 + $0x8] sm:$0xff]
      %v1401 = vld [vmem:[%s1398 + $0x10] sm:$0xff]
      %v1402 = vld [vmem:[%s1398 + $0x18] sm:$0xff]
      %s1403 = scalar_lea.vmem %s2, 16
      %v1404 = vld [vmem:[%s1403] sm:$0xff]
      %v1405 = vld [vmem:[%s1403 + $0x8] sm:$0xff]
      %1410 = vrot.lane.b32.xlu0 %v1394, 17
      %v1411 = vpop.permute.xlu0 %1410
      %1412 = vrot.lane.b32.xlu0 %v1395, 17
      %v1413 = vpop.permute.xlu0 %1412
      %1414 = vrot.lane.b32.xlu0 %v1396, 17
      %v1415 = vpop.permute.xlu0 %1414
      %1416 = vrot.lane.b32.xlu0 %v1397, 17
      %v1417 = vpop.permute.xlu0 %1416
      %v1418 = vsel %vm448, %v1411, %v1413
      %v1419 = vsel %vm448, %v1415, %v1417
      %v1426 = vsel %vm448, 0.0, %v1411
      %v1427 = vsel %vm448, 0.0, %v1415
      %v1428 = vsel %vm448, %v1413, 0.0
      %v1429 = vsel %vm448, %v1417, 0.0
      %v1430 = vmul.f32 %v1426, %v418
      %v1431 = vmul.f32 %v1418, %v419
      %v1432 = vmul.f32 %v1427, %v418
      %v1433 = vmul.f32 %v1419, %v419
      %v1434 = vmul.f32 %v1426, %v468
      %v1435 = vmul.f32 %v1418, %v472
      %v1436 = vmul.f32 %v1428, %v470
      %v1437 = vmul.f32 %v1427, %v468
      %v1438 = vmul.f32 %v1419, %v472
      %v1439 = vmul.f32 %v1429, %v470
      %v1440 = vmul.f32 %v1426, %v485
      %v1441 = vmul.f32 %v1418, %v489
      %v1442 = vmul.f32 %v1428, %v487
      %v1443 = vmul.f32 %v1427, %v485
      %v1444 = vmul.f32 %v1419, %v489
      %v1445 = vmul.f32 %v1429, %v487
      %v1446 = vmul.f32 %v1426, %v500
      %v1447 = vmul.f32 %v1418, %v504
      %v1448 = vmul.f32 %v1428, %v502
      %v1449 = vmul.f32 %v1427, %v500
      %v1450 = vmul.f32 %v1419, %v504
      %v1451 = vmul.f32 %v1429, %v502
      %v1452 = vmul.f32 %v1426, %v515
      %v1453 = vmul.f32 %v1418, %v519
      %v1454 = vmul.f32 %v1428, %v517
      %v1455 = vmul.f32 %v1427, %v515
      %v1456 = vmul.f32 %v1419, %v519
      %v1457 = vmul.f32 %v1429, %v517
      %v1458 = vmul.f32 %v1426, %v530
      %v1459 = vmul.f32 %v1418, %v534
      %v1460 = vmul.f32 %v1428, %v532
      %v1461 = vmul.f32 %v1427, %v530
      %v1462 = vmul.f32 %v1419, %v534
      %v1463 = vmul.f32 %v1429, %v532
      %1468 = vrot.lane.b32.xlu0 %v1426, 127
      %v1469 = vpop.permute.xlu0 %1468
      %1470 = vrot.lane.b32.xlu0 %v1418, 127
      %v1471 = vpop.permute.xlu0 %1470
      %1472 = vrot.lane.b32.xlu0 %v1428, 127
      %v1473 = vpop.permute.xlu0 %1472
      %1474 = vrot.lane.b32.xlu0 %v1427, 127
      %v1475 = vpop.permute.xlu0 %1474
      %1476 = vrot.lane.b32.xlu0 %v1419, 127
      %v1477 = vpop.permute.xlu0 %1476
      %1478 = vrot.lane.b32.xlu0 %v1429, 127
      %v1479 = vpop.permute.xlu0 %1478
      %v1480 = vsel %vm560, %v1469, %v1471
      %v1481 = vsel %vm560, %v1471, %v1473
      %v1482 = vsel %vm560, %v1475, %v1477
      %v1483 = vsel %vm560, %v1477, %v1479
      %1494 = vrot.lane.b32.xlu0 %v1434, 126
      %v1495 = vpop.permute.xlu0 %1494
      %1496 = vrot.lane.b32.xlu0 %v1435, 126
      %v1497 = vpop.permute.xlu0 %1496
      %1498 = vrot.lane.b32.xlu0 %v1436, 126
      %v1499 = vpop.permute.xlu0 %1498
      %1500 = vrot.lane.b32.xlu0 %v1437, 126
      %v1501 = vpop.permute.xlu0 %1500
      %1502 = vrot.lane.b32.xlu0 %v1438, 126
      %v1503 = vpop.permute.xlu0 %1502
      %1504 = vrot.lane.b32.xlu0 %v1439, 126
      %v1505 = vpop.permute.xlu0 %1504
      %v1506 = vsel %vm587, %v1495, %v1497
      %v1507 = vsel %vm587, %v1497, %v1499
      %v1508 = vsel %vm587, %v1501, %v1503
      %v1509 = vsel %vm587, %v1503, %v1505
      %1520 = vrot.lane.b32.xlu0 %v1440, 112
      %v1521 = vpop.permute.xlu0 %1520
      %1522 = vrot.lane.b32.xlu0 %v1441, 112
      %v1523 = vpop.permute.xlu0 %1522
      %1524 = vrot.lane.b32.xlu0 %v1442, 112
      %v1525 = vpop.permute.xlu0 %1524
      %1526 = vrot.lane.b32.xlu0 %v1443, 112
      %v1527 = vpop.permute.xlu0 %1526
      %1528 = vrot.lane.b32.xlu0 %v1444, 112
      %v1529 = vpop.permute.xlu0 %1528
      %1530 = vrot.lane.b32.xlu0 %v1445, 112
      %v1531 = vpop.permute.xlu0 %1530
      %v1532 = vsel %vm614, %v1521, %v1523
      %v1533 = vsel %vm614, %v1523, %v1525
      %v1534 = vsel %vm614, %v1527, %v1529
      %v1535 = vsel %vm614, %v1529, %v1531
      %1540 = vrot.lane.b32.xlu0 %v1426, 111
      %v1541 = vpop.permute.xlu0 %1540
      %1542 = vrot.lane.b32.xlu0 %v1418, 111
      %v1543 = vpop.permute.xlu0 %1542
      %1544 = vrot.lane.b32.xlu0 %v1428, 111
      %v1545 = vpop.permute.xlu0 %1544
      %1546 = vrot.lane.b32.xlu0 %v1427, 111
      %v1547 = vpop.permute.xlu0 %1546
      %1548 = vrot.lane.b32.xlu0 %v1419, 111
      %v1549 = vpop.permute.xlu0 %1548
      %1550 = vrot.lane.b32.xlu0 %v1429, 111
      %v1551 = vpop.permute.xlu0 %1550
      %v1552 = vsel %vm635, %v1541, %v1543
      %v1553 = vsel %vm635, %v1543, %v1545
      %v1554 = vsel %vm635, %v1547, %v1549
      %v1555 = vsel %vm635, %v1549, %v1551
      %1566 = vrot.lane.b32.xlu0 %v1446, 110
      %v1567 = vpop.permute.xlu0 %1566
      %1568 = vrot.lane.b32.xlu0 %v1447, 110
      %v1569 = vpop.permute.xlu0 %1568
      %1570 = vrot.lane.b32.xlu0 %v1448, 110
      %v1571 = vpop.permute.xlu0 %1570
      %1572 = vrot.lane.b32.xlu0 %v1449, 110
      %v1573 = vpop.permute.xlu0 %1572
      %1574 = vrot.lane.b32.xlu0 %v1450, 110
      %v1575 = vpop.permute.xlu0 %1574
      %1576 = vrot.lane.b32.xlu0 %v1451, 110
      %v1577 = vpop.permute.xlu0 %1576
      %v1578 = vsel %vm662, %v1567, %v1569
      %v1579 = vsel %vm662, %v1569, %v1571
      %v1580 = vsel %vm662, %v1573, %v1575
      %v1581 = vsel %vm662, %v1575, %v1577
      %1592 = vrot.lane.b32.xlu0 %v1452, 96
      %v1593 = vpop.permute.xlu0 %1592
      %1594 = vrot.lane.b32.xlu0 %v1453, 96
      %v1595 = vpop.permute.xlu0 %1594
      %1596 = vrot.lane.b32.xlu0 %v1454, 96
      %v1597 = vpop.permute.xlu0 %1596
      %1598 = vrot.lane.b32.xlu0 %v1455, 96
      %v1599 = vpop.permute.xlu0 %1598
      %1600 = vrot.lane.b32.xlu0 %v1456, 96
      %v1601 = vpop.permute.xlu0 %1600
      %1602 = vrot.lane.b32.xlu0 %v1457, 96
      %v1603 = vpop.permute.xlu0 %1602
      %v1604 = vsel %vm689, %v1593, %v1595
      %v1605 = vsel %vm689, %v1595, %v1597
      %v1606 = vsel %vm689, %v1599, %v1601
      %v1607 = vsel %vm689, %v1601, %v1603
      %1612 = vrot.lane.b32.xlu0 %v1426, 95
      %v1613 = vpop.permute.xlu0 %1612
      %1614 = vrot.lane.b32.xlu0 %v1418, 95
      %v1615 = vpop.permute.xlu0 %1614
      %1616 = vrot.lane.b32.xlu0 %v1428, 95
      %v1617 = vpop.permute.xlu0 %1616
      %1618 = vrot.lane.b32.xlu0 %v1427, 95
      %v1619 = vpop.permute.xlu0 %1618
      %1620 = vrot.lane.b32.xlu0 %v1419, 95
      %v1621 = vpop.permute.xlu0 %1620
      %1622 = vrot.lane.b32.xlu0 %v1429, 95
      %v1623 = vpop.permute.xlu0 %1622
      %v1624 = vsel %vm710, %v1613, %v1615
      %v1625 = vsel %vm710, %v1615, %v1617
      %v1626 = vsel %vm710, %v1619, %v1621
      %v1627 = vsel %vm710, %v1621, %v1623
      %1638 = vrot.lane.b32.xlu0 %v1458, 94
      %v1639 = vpop.permute.xlu0 %1638
      %1640 = vrot.lane.b32.xlu0 %v1459, 94
      %v1641 = vpop.permute.xlu0 %1640
      %1642 = vrot.lane.b32.xlu0 %v1460, 94
      %v1643 = vpop.permute.xlu0 %1642
      %1644 = vrot.lane.b32.xlu0 %v1461, 94
      %v1645 = vpop.permute.xlu0 %1644
      %1646 = vrot.lane.b32.xlu0 %v1462, 94
      %v1647 = vpop.permute.xlu0 %1646
      %1648 = vrot.lane.b32.xlu0 %v1463, 94
      %v1649 = vpop.permute.xlu0 %1648
      %v1650 = vsel %vm737, %v1639, %v1641
      %v1651 = vsel %vm737, %v1641, %v1643
      %v1652 = vsel %vm737, %v1645, %v1647
      %v1653 = vsel %vm737, %v1647, %v1649
      %1659 = vset.pattern.permute.xlu0 0
      %1660 = vperm.xlu0 %1659, %v1404
      %v1661 = vpop.permute.xlu0 %1660
      %1664 = vset.pattern.permute.xlu0 0
      %1665 = vperm.xlu0 %1664, %v1405
      %v1666 = vpop.permute.xlu0 %1665
      %v1669 = vsel %vm488, %v1400, 0
      %v1672 = vsel %vm488, %v1402, 0
      %1674 = vmatprep.subr.mxu0 %v1627
      %1675 = vmatpush1.msra.mxu0 %v1626
      %1676 = vmatprep.subr.mxu0 %v1625
      %1677 = vmatpush1.msra.mxu0 %v1624
      %1678 = vmatprep.subr.mxu0 %v1607
      %1679 = vmatpush1.msra.mxu0 %v1606
      %1680 = vmatprep.subr.mxu0 %v1605
      %1681 = vmatpush1.msra.mxu0 %v1604
      %1682 = vmatprep.subr.mxu0 %v1581
      %1683 = vmatpush1.msra.mxu0 %v1580
      %1684 = vmatprep.subr.mxu0 %v1579
      %1685 = vmatpush1.msra.mxu0 %v1578
      %1686 = vmatprep.subr.mxu0 %v1555
      %1687 = vmatpush1.msra.mxu0 %v1554
      %1688 = vmatprep.subr.mxu0 %v1553
      %1689 = vmatpush1.msra.mxu0 %v1552
      %1690 = vmatprep.subr.mxu0 %v1535
      %1691 = vmatpush1.msra.mxu0 %v1534
      %1692 = vmatprep.subr.mxu0 %v1533
      %1693 = vmatpush1.msra.mxu0 %v1532
      %1694 = vmatprep.subr.mxu0 %v1509
      %1695 = vmatpush1.msra.mxu0 %v1508
      %1696 = vmatprep.subr.mxu0 %v1507
      %1697 = vmatpush1.msra.mxu0 %v1506
      %1698 = vmatprep.subr.mxu0 %v1483
      %1699 = vmatpush1.msra.mxu0 %v1482
      %1700 = vmatprep.subr.mxu0 %v1481
      %1701 = vmatpush1.msra.mxu0 %v1480
      %1702 = vmatprep.subr.mxu0 %v1433
      %1703 = vmatpush1.msra.mxu0 %v1432
      %1704 = vmatprep.subr.mxu0 %v1431
      %1705 = vmatpush1.msra.mxu0 %v1430
      %1706 = vmatprep.subr.mxu0 0.0
      %1707 = vmatpush2.msra.mxu0 0.0
      %1708 = vmatprep.subr.mxu0 0.0
      %1709 = vmatpush2.msra.mxu0 0.0
      %1710 = vmatprep.subr.mxu0 0.0
      %1711 = vmatpush2.msra.mxu0 0.0
      %1712 = vmatprep.subr.mxu0 0.0
      %1713 = vmatpush2.msra.mxu0 0.0
      %1714 = vmatprep.subr.mxu0 0.0
      %1715 = vmatpush2.msra.mxu0 0.0
      %1716 = vmatprep.subr.mxu0 0.0
      %1717 = vmatpush2.msra.mxu0 0.0
      %1718 = vmatprep.subr.mxu0 0.0
      %1719 = vmatpush2.msra.mxu0 0.0
      %1720 = vmatprep.subr.mxu0 0.0
      %1721 = vmatpush2.msra.mxu0 0.0
      %1722 = vmatprep.subr.mxu0 0.0
      %1723 = vmatpush2.msra.mxu0 0.0
      %1724 = vmatprep.subr.mxu0 0.0
      %1725 = vmatpush2.msra.mxu0 0.0
      %1726 = vmatprep.subr.mxu0 0.0
      %1727 = vmatpush2.msra.mxu0 0.0
      %1728 = vmatprep.subr.mxu0 0.0
      %1729 = vmatpush2.msra.mxu0 0.0
      %1730 = vmatprep.subr.mxu0 0.0
      %1731 = vmatpush2.msra.mxu0 0.0
      %1732 = vmatprep.subr.mxu0 0.0
      %1733 = vmatpush2.msra.mxu0 0.0
      %1734 = vmatprep.subr.mxu0 %v1653
      %1735 = vmatpush2.msra.mxu0 %v1652
      %1736 = vmatprep.subr.mxu0 %v1651
      %1737 = vmatpush2.msra.mxu0 %v1650
      %1738 = vmatprep.mubr.f32.mxu0 %v1669
      %1739 = vmatmul.mubr.f32.gmra.mxu0 %v1399
      %v1740 = vpop.f32.mrf.mxu0
      %v1741 = vadd.f32 %v1661, %v1740
      %v1742 = vpop.f32.mrf.mxu0
      %v1743 = vadd.f32 %v1661, %v1742
      %1744 = vmatprep.mubr.f32.mxu0 %v1672
      %1745 = vmatmul.mubr.f32.gmra.mxu0 %v1401
      %v1746 = vpop.f32.mrf.mxu0
      %v1747 = vadd.f32 %v1666, %v1746
      %v1748 = vpop.f32.mrf.mxu0
      %v1749 = vadd.f32 %v1666, %v1748
      %1750 = vdwg.mxu0
      %v1751 = vmax.f32 %v1741, 0.0
      %v1752 = vmax.f32 %v1743, 0.0
      %v1753 = vmax.f32 %v1747, 0.0
      %v1754 = vmax.f32 %v1749, 0.0
      %s1755 = scalar_lea.vmem %s3, 32
      %v1756 = vld [vmem:[%s1755] sm:$0xff]
      %v1757 = vld [vmem:[%s1755 + $0x8] sm:$0xff]
      %v1758 = vld [vmem:[%s1755 + $0x10] sm:$0xff]
      %v1759 = vld [vmem:[%s1755 + $0x18] sm:$0xff]
      %s1760 = scalar_lea.vmem %s4, 16
      %v1761 = vld [vmem:[%s1760] sm:$0xff]
      %v1762 = vld [vmem:[%s1760 + $0x8] sm:$0xff]
      %1767 = vrot.lane.b32.xlu0 %v1751, 17
      %v1768 = vpop.permute.xlu0 %1767
      %1769 = vrot.lane.b32.xlu0 %v1752, 17
      %v1770 = vpop.permute.xlu0 %1769
      %1771 = vrot.lane.b32.xlu0 %v1753, 17
      %v1772 = vpop.permute.xlu0 %1771
      %1773 = vrot.lane.b32.xlu0 %v1754, 17
      %v1774 = vpop.permute.xlu0 %1773
      %v1775 = vsel %vm448, %v1768, %v1770
      %v1776 = vsel %vm448, %v1772, %v1774
      %v1783 = vsel %vm448, 0.0, %v1768
      %v1784 = vsel %vm448, 0.0, %v1772
      %v1785 = vsel %vm448, %v1770, 0.0
      %v1786 = vsel %vm448, %v1774, 0.0
      %v1787 = vmul.f32 %v1783, %v418
      %v1788 = vmul.f32 %v1775, %v419
      %v1789 = vmul.f32 %v1784, %v418
      %v1790 = vmul.f32 %v1776, %v419
      %v1791 = vmul.f32 %v1783, %v468
      %v1792 = vmul.f32 %v1775, %v472
      %v1793 = vmul.f32 %v1785, %v470
      %v1794 = vmul.f32 %v1784, %v468
      %v1795 = vmul.f32 %v1776, %v472
      %v1796 = vmul.f32 %v1786, %v470
      %v1797 = vmul.f32 %v1783, %v485
      %v1798 = vmul.f32 %v1775, %v489
      %v1799 = vmul.f32 %v1785, %v487
      %v1800 = vmul.f32 %v1784, %v485
      %v1801 = vmul.f32 %v1776, %v489
      %v1802 = vmul.f32 %v1786, %v487
      %v1803 = vmul.f32 %v1783, %v500
      %v1804 = vmul.f32 %v1775, %v504
      %v1805 = vmul.f32 %v1785, %v502
      %v1806 = vmul.f32 %v1784, %v500
      %v1807 = vmul.f32 %v1776, %v504
      %v1808 = vmul.f32 %v1786, %v502
      %v1809 = vmul.f32 %v1783, %v515
      %v1810 = vmul.f32 %v1775, %v519
      %v1811 = vmul.f32 %v1785, %v517
      %v1812 = vmul.f32 %v1784, %v515
      %v1813 = vmul.f32 %v1776, %v519
      %v1814 = vmul.f32 %v1786, %v517
      %v1815 = vmul.f32 %v1783, %v530
      %v1816 = vmul.f32 %v1775, %v534
      %v1817 = vmul.f32 %v1785, %v532
      %v1818 = vmul.f32 %v1784, %v530
      %v1819 = vmul.f32 %v1776, %v534
      %v1820 = vmul.f32 %v1786, %v532
      %1825 = vrot.lane.b32.xlu0 %v1783, 127
      %v1826 = vpop.permute.xlu0 %1825
      %1827 = vrot.lane.b32.xlu0 %v1775, 127
      %v1828 = vpop.permute.xlu0 %1827
      %1829 = vrot.lane.b32.xlu0 %v1785, 127
      %v1830 = vpop.permute.xlu0 %1829
      %1831 = vrot.lane.b32.xlu0 %v1784, 127
      %v1832 = vpop.permute.xlu0 %1831
      %1833 = vrot.lane.b32.xlu0 %v1776, 127
      %v1834 = vpop.permute.xlu0 %1833
      %1835 = vrot.lane.b32.xlu0 %v1786, 127
      %v1836 = vpop.permute.xlu0 %1835
      %v1837 = vsel %vm560, %v1826, %v1828
      %v1838 = vsel %vm560, %v1828, %v1830
      %v1839 = vsel %vm560, %v1832, %v1834
      %v1840 = vsel %vm560, %v1834, %v1836
      %1851 = vrot.lane.b32.xlu0 %v1791, 126
      %v1852 = vpop.permute.xlu0 %1851
      %1853 = vrot.lane.b32.xlu0 %v1792, 126
      %v1854 = vpop.permute.xlu0 %1853
      %1855 = vrot.lane.b32.xlu0 %v1793, 126
      %v1856 = vpop.permute.xlu0 %1855
      %1857 = vrot.lane.b32.xlu0 %v1794, 126
      %v1858 = vpop.permute.xlu0 %1857
      %1859 = vrot.lane.b32.xlu0 %v1795, 126
      %v1860 = vpop.permute.xlu0 %1859
      %1861 = vrot.lane.b32.xlu0 %v1796, 126
      %v1862 = vpop.permute.xlu0 %1861
      %v1863 = vsel %vm587, %v1852, %v1854
      %v1864 = vsel %vm587, %v1854, %v1856
      %v1865 = vsel %vm587, %v1858, %v1860
      %v1866 = vsel %vm587, %v1860, %v1862
      %1877 = vrot.lane.b32.xlu0 %v1797, 112
      %v1878 = vpop.permute.xlu0 %1877
      %1879 = vrot.lane.b32.xlu0 %v1798, 112
      %v1880 = vpop.permute.xlu0 %1879
      %1881 = vrot.lane.b32.xlu0 %v1799, 112
      %v1882 = vpop.permute.xlu0 %1881
      %1883 = vrot.lane.b32.xlu0 %v1800, 112
      %v1884 = vpop.permute.xlu0 %1883
      %1885 = vrot.lane.b32.xlu0 %v1801, 112
      %v1886 = vpop.permute.xlu0 %1885
      %1887 = vrot.lane.b32.xlu0 %v1802, 112
      %v1888 = vpop.permute.xlu0 %1887
      %v1889 = vsel %vm614, %v1878, %v1880
      %v1890 = vsel %vm614, %v1880, %v1882
      %v1891 = vsel %vm614, %v1884, %v1886
      %v1892 = vsel %vm614, %v1886, %v1888
      %1897 = vrot.lane.b32.xlu0 %v1783, 111
      %v1898 = vpop.permute.xlu0 %1897
      %1899 = vrot.lane.b32.xlu0 %v1775, 111
      %v1900 = vpop.permute.xlu0 %1899
      %1901 = vrot.lane.b32.xlu0 %v1785, 111
      %v1902 = vpop.permute.xlu0 %1901
      %1903 = vrot.lane.b32.xlu0 %v1784, 111
      %v1904 = vpop.permute.xlu0 %1903
      %1905 = vrot.lane.b32.xlu0 %v1776, 111
      %v1906 = vpop.permute.xlu0 %1905
      %1907 = vrot.lane.b32.xlu0 %v1786, 111
      %v1908 = vpop.permute.xlu0 %1907
      %v1909 = vsel %vm635, %v1898, %v1900
      %v1910 = vsel %vm635, %v1900, %v1902
      %v1911 = vsel %vm635, %v1904, %v1906
      %v1912 = vsel %vm635, %v1906, %v1908
      %1923 = vrot.lane.b32.xlu0 %v1803, 110
      %v1924 = vpop.permute.xlu0 %1923
      %1925 = vrot.lane.b32.xlu0 %v1804, 110
      %v1926 = vpop.permute.xlu0 %1925
      %1927 = vrot.lane.b32.xlu0 %v1805, 110
      %v1928 = vpop.permute.xlu0 %1927
      %1929 = vrot.lane.b32.xlu0 %v1806, 110
      %v1930 = vpop.permute.xlu0 %1929
      %1931 = vrot.lane.b32.xlu0 %v1807, 110
      %v1932 = vpop.permute.xlu0 %1931
      %1933 = vrot.lane.b32.xlu0 %v1808, 110
      %v1934 = vpop.permute.xlu0 %1933
      %v1935 = vsel %vm662, %v1924, %v1926
      %v1936 = vsel %vm662, %v1926, %v1928
      %v1937 = vsel %vm662, %v1930, %v1932
      %v1938 = vsel %vm662, %v1932, %v1934
      %1949 = vrot.lane.b32.xlu0 %v1809, 96
      %v1950 = vpop.permute.xlu0 %1949
      %1951 = vrot.lane.b32.xlu0 %v1810, 96
      %v1952 = vpop.permute.xlu0 %1951
      %1953 = vrot.lane.b32.xlu0 %v1811, 96
      %v1954 = vpop.permute.xlu0 %1953
      %1955 = vrot.lane.b32.xlu0 %v1812, 96
      %v1956 = vpop.permute.xlu0 %1955
      %1957 = vrot.lane.b32.xlu0 %v1813, 96
      %v1958 = vpop.permute.xlu0 %1957
      %1959 = vrot.lane.b32.xlu0 %v1814, 96
      %v1960 = vpop.permute.xlu0 %1959
      %v1961 = vsel %vm689, %v1950, %v1952
      %v1962 = vsel %vm689, %v1952, %v1954
      %v1963 = vsel %vm689, %v1956, %v1958
      %v1964 = vsel %vm689, %v1958, %v1960
      %1969 = vrot.lane.b32.xlu0 %v1783, 95
      %v1970 = vpop.permute.xlu0 %1969
      %1971 = vrot.lane.b32.xlu0 %v1775, 95
      %v1972 = vpop.permute.xlu0 %1971
      %1973 = vrot.lane.b32.xlu0 %v1785, 95
      %v1974 = vpop.permute.xlu0 %1973
      %1975 = vrot.lane.b32.xlu0 %v1784, 95
      %v1976 = vpop.permute.xlu0 %1975
      %1977 = vrot.lane.b32.xlu0 %v1776, 95
      %v1978 = vpop.permute.xlu0 %1977
      %1979 = vrot.lane.b32.xlu0 %v1786, 95
      %v1980 = vpop.permute.xlu0 %1979
      %v1981 = vsel %vm710, %v1970, %v1972
      %v1982 = vsel %vm710, %v1972, %v1974
      %v1983 = vsel %vm710, %v1976, %v1978
      %v1984 = vsel %vm710, %v1978, %v1980
      %1995 = vrot.lane.b32.xlu0 %v1815, 94
      %v1996 = vpop.permute.xlu0 %1995
      %1997 = vrot.lane.b32.xlu0 %v1816, 94
      %v1998 = vpop.permute.xlu0 %1997
      %1999 = vrot.lane.b32.xlu0 %v1817, 94
      %v2000 = vpop.permute.xlu0 %1999
      %2001 = vrot.lane.b32.xlu0 %v1818, 94
      %v2002 = vpop.permute.xlu0 %2001
      %2003 = vrot.lane.b32.xlu0 %v1819, 94
      %v2004 = vpop.permute.xlu0 %2003
      %2005 = vrot.lane.b32.xlu0 %v1820, 94
      %v2006 = vpop.permute.xlu0 %2005
      %v2007 = vsel %vm737, %v1996, %v1998
      %v2008 = vsel %vm737, %v1998, %v2000
      %v2009 = vsel %vm737, %v2002, %v2004
      %v2010 = vsel %vm737, %v2004, %v2006
      %2016 = vset.pattern.permute.xlu0 0
      %2017 = vperm.xlu0 %2016, %v1761
      %v2018 = vpop.permute.xlu0 %2017
      %2021 = vset.pattern.permute.xlu0 0
      %2022 = vperm.xlu0 %2021, %v1762
      %v2023 = vpop.permute.xlu0 %2022
      %v2026 = vsel %vm488, %v1757, 0
      %v2029 = vsel %vm488, %v1759, 0
      %2031 = vmatprep.subr.mxu0 %v1984
      %2032 = vmatpush1.msra.mxu0 %v1983
      %2033 = vmatprep.subr.mxu0 %v1982
      %2034 = vmatpush1.msra.mxu0 %v1981
      %2035 = vmatprep.subr.mxu0 %v1964
      %2036 = vmatpush1.msra.mxu0 %v1963
      %2037 = vmatprep.subr.mxu0 %v1962
      %2038 = vmatpush1.msra.mxu0 %v1961
      %2039 = vmatprep.subr.mxu0 %v1938
      %2040 = vmatpush1.msra.mxu0 %v1937
      %2041 = vmatprep.subr.mxu0 %v1936
      %2042 = vmatpush1.msra.mxu0 %v1935
      %2043 = vmatprep.subr.mxu0 %v1912
      %2044 = vmatpush1.msra.mxu0 %v1911
      %2045 = vmatprep.subr.mxu0 %v1910
      %2046 = vmatpush1.msra.mxu0 %v1909
      %2047 = vmatprep.subr.mxu0 %v1892
      %2048 = vmatpush1.msra.mxu0 %v1891
      %2049 = vmatprep.subr.mxu0 %v1890
      %2050 = vmatpush1.msra.mxu0 %v1889
      %2051 = vmatprep.subr.mxu0 %v1866
      %2052 = vmatpush1.msra.mxu0 %v1865
      %2053 = vmatprep.subr.mxu0 %v1864
      %2054 = vmatpush1.msra.mxu0 %v1863
      %2055 = vmatprep.subr.mxu0 %v1840
      %2056 = vmatpush1.msra.mxu0 %v1839
      %2057 = vmatprep.subr.mxu0 %v1838
      %2058 = vmatpush1.msra.mxu0 %v1837
      %2059 = vmatprep.subr.mxu0 %v1790
      %2060 = vmatpush1.msra.mxu0 %v1789
      %2061 = vmatprep.subr.mxu0 %v1788
      %2062 = vmatpush1.msra.mxu0 %v1787
      %2063 = vmatprep.subr.mxu0 0.0
      %2064 = vmatpush2.msra.mxu0 0.0
      %2065 = vmatprep.subr.mxu0 0.0
      %2066 = vmatpush2.msra.mxu0 0.0
      %2067 = vmatprep.subr.mxu0 0.0
      %2068 = vmatpush2.msra.mxu0 0.0
      %2069 = vmatprep.subr.mxu0 0.0
      %2070 = vmatpush2.msra.mxu0 0.0
      %2071 = vmatprep.subr.mxu0 0.0
      %2072 = vmatpush2.msra.mxu0 0.0
      %2073 = vmatprep.subr.mxu0 0.0
      %2074 = vmatpush2.msra.mxu0 0.0
      %2075 = vmatprep.subr.mxu0 0.0
      %2076 = vmatpush2.msra.mxu0 0.0
      %2077 = vmatprep.subr.mxu0 0.0
      %2078 = vmatpush2.msra.mxu0 0.0
      %2079 = vmatprep.subr.mxu0 0.0
      %2080 = vmatpush2.msra.mxu0 0.0
      %2081 = vmatprep.subr.mxu0 0.0
      %2082 = vmatpush2.msra.mxu0 0.0
      %2083 = vmatprep.subr.mxu0 0.0
      %2084 = vmatpush2.msra.mxu0 0.0
      %2085 = vmatprep.subr.mxu0 0.0
      %2086 = vmatpush2.msra.mxu0 0.0
      %2087 = vmatprep.subr.mxu0 0.0
      %2088 = vmatpush2.msra.mxu0 0.0
      %2089 = vmatprep.subr.mxu0 0.0
      %2090 = vmatpush2.msra.mxu0 0.0
      %2091 = vmatprep.subr.mxu0 %v2010
      %2092 = vmatpush2.msra.mxu0 %v2009
      %2093 = vmatprep.subr.mxu0 %v2008
      %2094 = vmatpush2.msra.mxu0 %v2007
      %2095 = vmatprep.mubr.f32.mxu0 %v2026
      %2096 = vmatmul.mubr.f32.gmra.mxu0 %v1756
      %v2097 = vpop.f32.mrf.mxu0
      %v2098 = vadd.f32 %v2018, %v2097
      %v2099 = vpop.f32.mrf.mxu0
      %v2100 = vadd.f32 %v2018, %v2099
      %2101 = vmatprep.mubr.f32.mxu0 %v2029
      %2102 = vmatmul.mubr.f32.gmra.mxu0 %v1758
      %v2103 = vpop.f32.mrf.mxu0
      %v2104 = vadd.f32 %v2023, %v2103
      %v2105 = vpop.f32.mrf.mxu0
      %v2106 = vadd.f32 %v2023, %v2105
      %2107 = vdwg.mxu0
      %v2108 = vadd.f32 %v2098, %v2100
      %2109 = vadd.xlane.f32.xlu0 %v2108
      %v2110 = vpop.xlane.xlu0 %2109
      %v2111 = vadd.f32 %v2104, %v2106
      %2112 = vadd.xlane.f32.xlu0 %v2111
      %v2113 = vpop.xlane.xlu0 %2112
      %v2114 = vmul.f32 %v2110, 0.00390625
      %v2115 = vmul.f32 %v2113, 0.00390625
      %s2116 = scalar_lea.vmem %s5, 4
      %v2117 = vld [vmem:[%s2116] sm:$0xf]
      %s2118 = scalar_lea.vmem %s6, 4
      %v2119 = vld [vmem:[%s2118] sm:$0xf]
      %v2121 = vsel %vm488, %v2117, 0
      %2123 = vmatprep.subr.mxu0 0.0
      %2124 = vmatpush1.msra.mxu0 0.0
      %2125 = vmatprep.subr.mxu0 0.0
      %2126 = vmatpush1.msra.mxu0 0.0
      %2127 = vmatprep.subr.mxu0 0.0
      %2128 = vmatpush1.msra.mxu0 0.0
      %2129 = vmatprep.subr.mxu0 0.0
      %2130 = vmatpush1.msra.mxu0 0.0
      %2131 = vmatprep.subr.mxu0 0.0
      %2132 = vmatpush1.msra.mxu0 0.0
      %2133 = vmatprep.subr.mxu0 0.0
      %2134 = vmatpush1.msra.mxu0 0.0
      %2135 = vmatprep.subr.mxu0 0.0
      %2136 = vmatpush1.msra.mxu0 0.0
      %2137 = vmatprep.subr.mxu0 0.0
      %2138 = vmatpush1.msra.mxu0 0.0
      %2139 = vmatprep.subr.mxu0 0.0
      %2140 = vmatpush1.msra.mxu0 0.0
      %2141 = vmatprep.subr.mxu0 0.0
      %2142 = vmatpush1.msra.mxu0 0.0
      %2143 = vmatprep.subr.mxu0 0.0
      %2144 = vmatpush1.msra.mxu0 0.0
      %2145 = vmatprep.subr.mxu0 0.0
      %2146 = vmatpush1.msra.mxu0 0.0
      %2147 = vmatprep.subr.mxu0 0.0
      %2148 = vmatpush1.msra.mxu0 0.0
      %2149 = vmatprep.subr.mxu0 0.0
      %2150 = vmatpush1.msra.mxu0 0.0
      %2151 = vmatprep.subr.mxu0 0.0
      %2152 = vmatpush1.msra.mxu0 %v2115
      %2153 = vmatprep.subr.mxu0 0.0
      %2154 = vmatpush1.msra.mxu0 %v2114
      %2155 = vmatprep.subr.mxu0 0.0
      %2156 = vmatpush2.msra.mxu0 0.0
      %2157 = vmatprep.subr.mxu0 0.0
      %2158 = vmatpush2.msra.mxu0 0.0
      %2159 = vmatprep.subr.mxu0 0.0
      %2160 = vmatpush2.msra.mxu0 0.0
      %2161 = vmatprep.subr.mxu0 0.0
      %2162 = vmatpush2.msra.mxu0 0.0
      %2163 = vmatprep.subr.mxu0 0.0
      %2164 = vmatpush2.msra.mxu0 0.0
      %2165 = vmatprep.subr.mxu0 0.0
      %2166 = vmatpush2.msra.mxu0 0.0
      %2167 = vmatprep.subr.mxu0 0.0
      %2168 = vmatpush2.msra.mxu0 0.0
      %2169 = vmatprep.subr.mxu0 0.0
      %2170 = vmatpush2.msra.mxu0 0.0
      %2171 = vmatprep.subr.mxu0 0.0
      %2172 = vmatpush2.msra.mxu0 0.0
      %2173 = vmatprep.subr.mxu0 0.0
      %2174 = vmatpush2.msra.mxu0 0.0
      %2175 = vmatprep.subr.mxu0 0.0
      %2176 = vmatpush2.msra.mxu0 0.0
      %2177 = vmatprep.subr.mxu0 0.0
      %2178 = vmatpush2.msra.mxu0 0.0
      %2179 = vmatprep.subr.mxu0 0.0
      %2180 = vmatpush2.msra.mxu0 0.0
      %2181 = vmatprep.subr.mxu0 0.0
      %2182 = vmatpush2.msra.mxu0 0.0
      %2183 = vmatprep.subr.mxu0 0.0
      %2184 = vmatpush2.msra.mxu0 0.0
      %2185 = vmatprep.subr.mxu0 0.0
      %2186 = vmatpush2.msra.mxu0 0.0
      %2187 = vmatprep.mubr.f32.mxu0 0.0
      %2188 = vmatmul.mubr.f32.gmra.mxu0 %v2121
      %v2189 = vpop.f32.mrf.mxu0
      %v2190 = vadd.f32 %v2119, %v2189
      %v2191 = vpop.f32.mrf.mxu0
      %2192 = vdwg.mxu0
      %v2193 = vmax.f32 %v2190, 0.0
      %s2194 = scalar_lea.vmem %s7, 16
      %v2195 = vld [vmem:[%s2194] sm:$0xff]
      %v2196 = vld [vmem:[%s2194 + $0x8] sm:$0xff]
      %s2197 = scalar_lea.vmem %s8, 16
      %v2198 = vld [vmem:[%s2197] sm:$0xff]
      %v2199 = vld [vmem:[%s2197 + $0x8] sm:$0xff]
      %v2201 = vsel %vm1282, %v2195, 0
      %v2204 = vsel %vm1282, %v2196, 0
      %v2207 = vsel %vm1289, %v2193, 0
      %2209 = vmatprep.subr.mxu0 0.0
      %2210 = vmatpush1.msra.mxu0 0.0
      %2211 = vmatprep.subr.mxu0 0.0
      %2212 = vmatpush1.msra.mxu0 0.0
      %2213 = vmatprep.subr.mxu0 0.0
      %2214 = vmatpush1.msra.mxu0 0.0
      %2215 = vmatprep.subr.mxu0 0.0
      %2216 = vmatpush1.msra.mxu0 0.0
      %2217 = vmatprep.subr.mxu0 0.0
      %2218 = vmatpush1.msra.mxu0 0.0
      %2219 = vmatprep.subr.mxu0 0.0
      %2220 = vmatpush1.msra.mxu0 0.0
      %2221 = vmatprep.subr.mxu0 0.0
      %2222 = vmatpush1.msra.mxu0 0.0
      %2223 = vmatprep.subr.mxu0 0.0
      %2224 = vmatpush1.msra.mxu0 0.0
      %2225 = vmatprep.subr.mxu0 0.0
      %2226 = vmatpush1.msra.mxu0 0.0
      %2227 = vmatprep.subr.mxu0 0.0
      %2228 = vmatpush1.msra.mxu0 0.0
      %2229 = vmatprep.subr.mxu0 0.0
      %2230 = vmatpush1.msra.mxu0 0.0
      %2231 = vmatprep.subr.mxu0 0.0
      %2232 = vmatpush1.msra.mxu0 0.0
      %2233 = vmatprep.subr.mxu0 0.0
      %2234 = vmatpush1.msra.mxu0 0.0
      %2235 = vmatprep.subr.mxu0 0.0
      %2236 = vmatpush1.msra.mxu0 0.0
      %2237 = vmatprep.subr.mxu0 0.0
      %2238 = vmatpush1.msra.mxu0 0.0
      %2239 = vmatprep.subr.mxu0 0.0
      %2240 = vmatpush1.msra.mxu0 %v2207
      %2241 = vmatprep.subr.mxu0 0.0
      %2242 = vmatpush2.msra.mxu0 0.0
      %2243 = vmatprep.subr.mxu0 0.0
      %2244 = vmatpush2.msra.mxu0 0.0
      %2245 = vmatprep.subr.mxu0 0.0
      %2246 = vmatpush2.msra.mxu0 0.0
      %2247 = vmatprep.subr.mxu0 0.0
      %2248 = vmatpush2.msra.mxu0 0.0
      %2249 = vmatprep.subr.mxu0 0.0
      %2250 = vmatpush2.msra.mxu0 0.0
      %2251 = vmatprep.subr.mxu0 0.0
      %2252 = vmatpush2.msra.mxu0 0.0
      %2253 = vmatprep.subr.mxu0 0.0
      %2254 = vmatpush2.msra.mxu0 0.0
      %2255 = vmatprep.subr.mxu0 0.0
      %2256 = vmatpush2.msra.mxu0 0.0
      %2257 = vmatprep.subr.mxu0 0.0
      %2258 = vmatpush2.msra.mxu0 0.0
      %2259 = vmatprep.subr.mxu0 0.0
      %2260 = vmatpush2.msra.mxu0 0.0
      %2261 = vmatprep.subr.mxu0 0.0
      %2262 = vmatpush2.msra.mxu0 0.0
      %2263 = vmatprep.subr.mxu0 0.0
      %2264 = vmatpush2.msra.mxu0 0.0
      %2265 = vmatprep.subr.mxu0 0.0
      %2266 = vmatpush2.msra.mxu0 0.0
      %2267 = vmatprep.subr.mxu0 0.0
      %2268 = vmatpush2.msra.mxu0 0.0
      %2269 = vmatprep.subr.mxu0 0.0
      %2270 = vmatpush2.msra.mxu0 0.0
      %2271 = vmatprep.subr.mxu0 0.0
      %2272 = vmatpush2.msra.mxu0 0.0
      %2273 = vmatprep.mubr.f32.mxu0 0.0
      %2274 = vmatmul.mubr.f32.gmra.mxu0 %v2201
      %v2275 = vpop.f32.mrf.mxu0
      %v2276 = vadd.f32 %v2198, %v2275
      %v2277 = vpop.f32.mrf.mxu0
      %2278 = vmatprep.mubr.f32.mxu0 0.0
      %2279 = vmatmul.mubr.f32.gmra.mxu0 %v2204
      %v2280 = vpop.f32.mrf.mxu0
      %v2281 = vadd.f32 %v2199, %v2280
      %v2282 = vpop.f32.mrf.mxu0
      %2283 = vdwg.mxu0
      %v2284 = vxor.u32 %v2276, 2147483648
      %v2285 = vxor.u32 %v2281, 2147483648
      %v2286 = vmul.f32 %v2284, 1.442695
      %v2287 = vpow.pop %v2286
      %v2288 = vmul.f32 %v2285, 1.442695
      %v2289 = vpow.pop %v2288
      %v2290 = vadd.f32 %v2287, 1.0
      %v2291 = vadd.f32 %v2289, 1.0
      %v2292 = vrcp.pop %v2290
      %v2293 = vmul.f32 1.0, %v2292
      %v2294 = vrcp.pop %v2291
      %v2295 = vmul.f32 1.0, %v2294
      %2297 = vset.pattern.permute.xlu0 0
      %2298 = vperm.xlu0 %2297, %v2293
      %v2299 = vpop.permute.xlu0 %2298
      %2302 = vset.pattern.permute.xlu0 0
      %2303 = vperm.xlu0 %2302, %v2295
      %v2304 = vpop.permute.xlu0 %2303
      %v2306 = vmul.f32 %v2098, %v2299
      %v2307 = vmul.f32 %v2100, %v2299
      %v2308 = vmul.f32 %v2104, %v2304
      %v2309 = vmul.f32 %v2106, %v2304
      %v2310 = vadd.f32 %v2306, %v1394
      %v2311 = vadd.f32 %v2307, %v1395
      %v2312 = vadd.f32 %v2308, %v1396
      %v2313 = vadd.f32 %v2309, %v1397
      %v2314 = vld [vmem:[%s9] sm:$0xff]
      %v2315 = vld [vmem:[%s9 + $0x8] sm:$0xff]
      %v2316 = vld [vmem:[%s9 + $0x10] sm:$0xff]
      %v2317 = vld [vmem:[%s9 + $0x18] sm:$0xff]
      %v2318 = vld [vmem:[%s10] sm:$0xff]
      %v2319 = vld [vmem:[%s10 + $0x8] sm:$0xff]
      %2324 = vrot.lane.b32.xlu0 %v2310, 17
      %v2325 = vpop.permute.xlu0 %2324
      %2326 = vrot.lane.b32.xlu0 %v2311, 17
      %v2327 = vpop.permute.xlu0 %2326
      %2328 = vrot.lane.b32.xlu0 %v2312, 17
      %v2329 = vpop.permute.xlu0 %2328
      %2330 = vrot.lane.b32.xlu0 %v2313, 17
      %v2331 = vpop.permute.xlu0 %2330
      %v2332 = vsel %vm448, %v2325, %v2327
      %v2333 = vsel %vm448, %v2329, %v2331
      %v2340 = vsel %vm448, 0.0, %v2325
      %v2341 = vsel %vm448, 0.0, %v2329
      %v2342 = vsel %vm448, %v2327, 0.0
      %v2343 = vsel %vm448, %v2331, 0.0
      %v2344 = vmul.f32 %v2340, %v418
      %v2345 = vmul.f32 %v2332, %v419
      %v2346 = vmul.f32 %v2341, %v418
      %v2347 = vmul.f32 %v2333, %v419
      %v2348 = vmul.f32 %v2340, %v468
      %v2349 = vmul.f32 %v2332, %v472
      %v2350 = vmul.f32 %v2342, %v470
      %v2351 = vmul.f32 %v2341, %v468
      %v2352 = vmul.f32 %v2333, %v472
      %v2353 = vmul.f32 %v2343, %v470
      %v2354 = vmul.f32 %v2340, %v485
      %v2355 = vmul.f32 %v2332, %v489
      %v2356 = vmul.f32 %v2342, %v487
      %v2357 = vmul.f32 %v2341, %v485
      %v2358 = vmul.f32 %v2333, %v489
      %v2359 = vmul.f32 %v2343, %v487
      %v2360 = vmul.f32 %v2340, %v500
      %v2361 = vmul.f32 %v2332, %v504
      %v2362 = vmul.f32 %v2342, %v502
      %v2363 = vmul.f32 %v2341, %v500
      %v2364 = vmul.f32 %v2333, %v504
      %v2365 = vmul.f32 %v2343, %v502
      %v2366 = vmul.f32 %v2340, %v515
      %v2367 = vmul.f32 %v2332, %v519
      %v2368 = vmul.f32 %v2342, %v517
      %v2369 = vmul.f32 %v2341, %v515
      %v2370 = vmul.f32 %v2333, %v519
      %v2371 = vmul.f32 %v2343, %v517
      %v2372 = vmul.f32 %v2340, %v530
      %v2373 = vmul.f32 %v2332, %v534
      %v2374 = vmul.f32 %v2342, %v532
      %v2375 = vmul.f32 %v2341, %v530
      %v2376 = vmul.f32 %v2333, %v534
      %v2377 = vmul.f32 %v2343, %v532
      %2382 = vrot.lane.b32.xlu0 %v2340, 127
      %v2383 = vpop.permute.xlu0 %2382
      %2384 = vrot.lane.b32.xlu0 %v2332, 127
      %v2385 = vpop.permute.xlu0 %2384
      %2386 = vrot.lane.b32.xlu0 %v2342, 127
      %v2387 = vpop.permute.xlu0 %2386
      %2388 = vrot.lane.b32.xlu0 %v2341, 127
      %v2389 = vpop.permute.xlu0 %2388
      %2390 = vrot.lane.b32.xlu0 %v2333, 127
      %v2391 = vpop.permute.xlu0 %2390
      %2392 = vrot.lane.b32.xlu0 %v2343, 127
      %v2393 = vpop.permute.xlu0 %2392
      %v2394 = vsel %vm560, %v2383, %v2385
      %v2395 = vsel %vm560, %v2385, %v2387
      %v2396 = vsel %vm560, %v2389, %v2391
      %v2397 = vsel %vm560, %v2391, %v2393
      %2408 = vrot.lane.b32.xlu0 %v2348, 126
      %v2409 = vpop.permute.xlu0 %2408
      %2410 = vrot.lane.b32.xlu0 %v2349, 126
      %v2411 = vpop.permute.xlu0 %2410
      %2412 = vrot.lane.b32.xlu0 %v2350, 126
      %v2413 = vpop.permute.xlu0 %2412
      %2414 = vrot.lane.b32.xlu0 %v2351, 126
      %v2415 = vpop.permute.xlu0 %2414
      %2416 = vrot.lane.b32.xlu0 %v2352, 126
      %v2417 = vpop.permute.xlu0 %2416
      %2418 = vrot.lane.b32.xlu0 %v2353, 126
      %v2419 = vpop.permute.xlu0 %2418
      %v2420 = vsel %vm587, %v2409, %v2411
      %v2421 = vsel %vm587, %v2411, %v2413
      %v2422 = vsel %vm587, %v2415, %v2417
      %v2423 = vsel %vm587, %v2417, %v2419
      %2434 = vrot.lane.b32.xlu0 %v2354, 112
      %v2435 = vpop.permute.xlu0 %2434
      %2436 = vrot.lane.b32.xlu0 %v2355, 112
      %v2437 = vpop.permute.xlu0 %2436
      %2438 = vrot.lane.b32.xlu0 %v2356, 112
      %v2439 = vpop.permute.xlu0 %2438
      %2440 = vrot.lane.b32.xlu0 %v2357, 112
      %v2441 = vpop.permute.xlu0 %2440
      %2442 = vrot.lane.b32.xlu0 %v2358, 112
      %v2443 = vpop.permute.xlu0 %2442
      %2444 = vrot.lane.b32.xlu0 %v2359, 112
      %v2445 = vpop.permute.xlu0 %2444
      %v2446 = vsel %vm614, %v2435, %v2437
      %v2447 = vsel %vm614, %v2437, %v2439
      %v2448 = vsel %vm614, %v2441, %v2443
      %v2449 = vsel %vm614, %v2443, %v2445
      %2454 = vrot.lane.b32.xlu0 %v2340, 111
      %v2455 = vpop.permute.xlu0 %2454
      %2456 = vrot.lane.b32.xlu0 %v2332, 111
      %v2457 = vpop.permute.xlu0 %2456
      %2458 = vrot.lane.b32.xlu0 %v2342, 111
      %v2459 = vpop.permute.xlu0 %2458
      %2460 = vrot.lane.b32.xlu0 %v2341, 111
      %v2461 = vpop.permute.xlu0 %2460
      %2462 = vrot.lane.b32.xlu0 %v2333, 111
      %v2463 = vpop.permute.xlu0 %2462
      %2464 = vrot.lane.b32.xlu0 %v2343, 111
      %v2465 = vpop.permute.xlu0 %2464
      %v2466 = vsel %vm635, %v2455, %v2457
      %v2467 = vsel %vm635, %v2457, %v2459
      %v2468 = vsel %vm635, %v2461, %v2463
      %v2469 = vsel %vm635, %v2463, %v2465
      %2480 = vrot.lane.b32.xlu0 %v2360, 110
      %v2481 = vpop.permute.xlu0 %2480
      %2482 = vrot.lane.b32.xlu0 %v2361, 110
      %v2483 = vpop.permute.xlu0 %2482
      %2484 = vrot.lane.b32.xlu0 %v2362, 110
      %v2485 = vpop.permute.xlu0 %2484
      %2486 = vrot.lane.b32.xlu0 %v2363, 110
      %v2487 = vpop.permute.xlu0 %2486
      %2488 = vrot.lane.b32.xlu0 %v2364, 110
      %v2489 = vpop.permute.xlu0 %2488
      %2490 = vrot.lane.b32.xlu0 %v2365, 110
      %v2491 = vpop.permute.xlu0 %2490
      %v2492 = vsel %vm662, %v2481, %v2483
      %v2493 = vsel %vm662, %v2483, %v2485
      %v2494 = vsel %vm662, %v2487, %v2489
      %v2495 = vsel %vm662, %v2489, %v2491
      %2506 = vrot.lane.b32.xlu0 %v2366, 96
      %v2507 = vpop.permute.xlu0 %2506
      %2508 = vrot.lane.b32.xlu0 %v2367, 96
      %v2509 = vpop.permute.xlu0 %2508
      %2510 = vrot.lane.b32.xlu0 %v2368, 96
      %v2511 = vpop.permute.xlu0 %2510
      %2512 = vrot.lane.b32.xlu0 %v2369, 96
      %v2513 = vpop.permute.xlu0 %2512
      %2514 = vrot.lane.b32.xlu0 %v2370, 96
      %v2515 = vpop.permute.xlu0 %2514
      %2516 = vrot.lane.b32.xlu0 %v2371, 96
      %v2517 = vpop.permute.xlu0 %2516
      %v2518 = vsel %vm689, %v2507, %v2509
      %v2519 = vsel %vm689, %v2509, %v2511
      %v2520 = vsel %vm689, %v2513, %v2515
      %v2521 = vsel %vm689, %v2515, %v2517
      %2526 = vrot.lane.b32.xlu0 %v2340, 95
      %v2527 = vpop.permute.xlu0 %2526
      %2528 = vrot.lane.b32.xlu0 %v2332, 95
      %v2529 = vpop.permute.xlu0 %2528
      %2530 = vrot.lane.b32.xlu0 %v2342, 95
      %v2531 = vpop.permute.xlu0 %2530
      %2532 = vrot.lane.b32.xlu0 %v2341, 95
      %v2533 = vpop.permute.xlu0 %2532
      %2534 = vrot.lane.b32.xlu0 %v2333, 95
      %v2535 = vpop.permute.xlu0 %2534
      %2536 = vrot.lane.b32.xlu0 %v2343, 95
      %v2537 = vpop.permute.xlu0 %2536
      %v2538 = vsel %vm710, %v2527, %v2529
      %v2539 = vsel %vm710, %v2529, %v2531
      %v2540 = vsel %vm710, %v2533, %v2535
      %v2541 = vsel %vm710, %v2535, %v2537
      %2552 = vrot.lane.b32.xlu0 %v2372, 94
      %v2553 = vpop.permute.xlu0 %2552
      %2554 = vrot.lane.b32.xlu0 %v2373, 94
      %v2555 = vpop.permute.xlu0 %2554
      %2556 = vrot.lane.b32.xlu0 %v2374, 94
      %v2557 = vpop.permute.xlu0 %2556
      %2558 = vrot.lane.b32.xlu0 %v2375, 94
      %v2559 = vpop.permute.xlu0 %2558
      %2560 = vrot.lane.b32.xlu0 %v2376, 94
      %v2561 = vpop.permute.xlu0 %2560
      %2562 = vrot.lane.b32.xlu0 %v2377, 94
      %v2563 = vpop.permute.xlu0 %2562
      %v2564 = vsel %vm737, %v2553, %v2555
      %v2565 = vsel %vm737, %v2555, %v2557
      %v2566 = vsel %vm737, %v2559, %v2561
      %v2567 = vsel %vm737, %v2561, %v2563
      %2573 = vset.pattern.permute.xlu0 0
      %2574 = vperm.xlu0 %2573, %v2318
      %v2575 = vpop.permute.xlu0 %2574
      %2578 = vset.pattern.permute.xlu0 0
      %2579 = vperm.xlu0 %2578, %v2319
      %v2580 = vpop.permute.xlu0 %2579
      %v2583 = vsel %vm488, %v2315, 0
      %v2586 = vsel %vm488, %v2317, 0
      %2588 = vmatprep.subr.mxu0 %v2541
      %2589 = vmatpush1.msra.mxu0 %v2540
      %2590 = vmatprep.subr.mxu0 %v2539
      %2591 = vmatpush1.msra.mxu0 %v2538
      %2592 = vmatprep.subr.mxu0 %v2521
      %2593 = vmatpush1.msra.mxu0 %v2520
      %2594 = vmatprep.subr.mxu0 %v2519
      %2595 = vmatpush1.msra.mxu0 %v2518
      %2596 = vmatprep.subr.mxu0 %v2495
      %2597 = vmatpush1.msra.mxu0 %v2494
      %2598 = vmatprep.subr.mxu0 %v2493
      %2599 = vmatpush1.msra.mxu0 %v2492
      %2600 = vmatprep.subr.mxu0 %v2469
      %2601 = vmatpush1.msra.mxu0 %v2468
      %2602 = vmatprep.subr.mxu0 %v2467
      %2603 = vmatpush1.msra.mxu0 %v2466
      %2604 = vmatprep.subr.mxu0 %v2449
      %2605 = vmatpush1.msra.mxu0 %v2448
      %2606 = vmatprep.subr.mxu0 %v2447
      %2607 = vmatpush1.msra.mxu0 %v2446
      %2608 = vmatprep.subr.mxu0 %v2423
      %2609 = vmatpush1.msra.mxu0 %v2422
      %2610 = vmatprep.subr.mxu0 %v2421
      %2611 = vmatpush1.msra.mxu0 %v2420
      %2612 = vmatprep.subr.mxu0 %v2397
      %2613 = vmatpush1.msra.mxu0 %v2396
      %2614 = vmatprep.subr.mxu0 %v2395
      %2615 = vmatpush1.msra.mxu0 %v2394
      %2616 = vmatprep.subr.mxu0 %v2347
      %2617 = vmatpush1.msra.mxu0 %v2346
      %2618 = vmatprep.subr.mxu0 %v2345
      %2619 = vmatpush1.msra.mxu0 %v2344
      %2620 = vmatprep.subr.mxu0 0.0
      %2621 = vmatpush2.msra.mxu0 0.0
      %2622 = vmatprep.subr.mxu0 0.0
      %2623 = vmatpush2.msra.mxu0 0.0
      %2624 = vmatprep.subr.mxu0 0.0
      %2625 = vmatpush2.msra.mxu0 0.0
      %2626 = vmatprep.subr.mxu0 0.0
      %2627 = vmatpush2.msra.mxu0 0.0
      %2628 = vmatprep.subr.mxu0 0.0
      %2629 = vmatpush2.msra.mxu0 0.0
      %2630 = vmatprep.subr.mxu0 0.0
      %2631 = vmatpush2.msra.mxu0 0.0
      %2632 = vmatprep.subr.mxu0 0.0
      %2633 = vmatpush2.msra.mxu0 0.0
      %2634 = vmatprep.subr.mxu0 0.0
      %2635 = vmatpush2.msra.mxu0 0.0
      %2636 = vmatprep.subr.mxu0 0.0
      %2637 = vmatpush2.msra.mxu0 0.0
      %2638 = vmatprep.subr.mxu0 0.0
      %2639 = vmatpush2.msra.mxu0 0.0
      %2640 = vmatprep.subr.mxu0 0.0
      %2641 = vmatpush2.msra.mxu0 0.0
      %2642 = vmatprep.subr.mxu0 0.0
      %2643 = vmatpush2.msra.mxu0 0.0
      %2644 = vmatprep.subr.mxu0 0.0
      %2645 = vmatpush2.msra.mxu0 0.0
      %2646 = vmatprep.subr.mxu0 0.0
      %2647 = vmatpush2.msra.mxu0 0.0
      %2648 = vmatprep.subr.mxu0 %v2567
      %2649 = vmatpush2.msra.mxu0 %v2566
      %2650 = vmatprep.subr.mxu0 %v2565
      %2651 = vmatpush2.msra.mxu0 %v2564
      %2652 = vmatprep.mubr.f32.mxu0 %v2583
      %2653 = vmatmul.mubr.f32.gmra.mxu0 %v2314
      %v2654 = vpop.f32.mrf.mxu0
      %v2655 = vadd.f32 %v2575, %v2654
      %v2656 = vpop.f32.mrf.mxu0
      %v2657 = vadd.f32 %v2575, %v2656
      %2658 = vmatprep.mubr.f32.mxu0 %v2586
      %2659 = vmatmul.mubr.f32.gmra.mxu0 %v2316
      %v2660 = vpop.f32.mrf.mxu0
      %v2661 = vadd.f32 %v2580, %v2660
      %v2662 = vpop.f32.mrf.mxu0
      %v2663 = vadd.f32 %v2580, %v2662
      %2664 = vdwg.mxu0
      %v2665 = vadd.f32 %v2655, %v426
      %v2666 = vadd.f32 %v2657, %v427
      %v2667 = vadd.f32 %v2661, %v428
      %v2668 = vadd.f32 %v2663, %v429
      %2669 = vst [vmem:[%s386] sm:$0xff] %v2665
      %2670 = vst [vmem:[%s386 + $0x8] sm:$0xff] %v2666
      %2671 = vst [vmem:[%s386 + $0x10] sm:$0xff] %v2667
      %2672 = vst [vmem:[%s386 + $0x18] sm:$0xff] %v2668
      %p2673 = scmp.lt.s32.totalorder %s22, 1
      %s2674 = scalar_select %p2673, %s22, 1
      %s2675 = smul.addr %s2674, 4
      %s2676 = smul.addr %s2675, 8
      %s2677 = scalar_lea.vmem %s11, %s2676
      // Predicated region
      $region65: #{residual_group_forward.1} parent=63 // pred_check
        %p2678 = pneg %p276
      $region66: #{residual_group_forward.1} parent=63 // pred_check_branch
        %2680 = sbr.rel (%p2678) target = $region68
      $region67: #{residual_group_forward.1} parent=63 // pred_region
        _
      $region68: #{residual_group_forward.1} parent=63 // pred_fallthru
        _
    $region64: #{residual_group_forward.1} parent=5 // pred_fallthru
      _
    %p2681 = scmp.le.s32.totalorder 2, %s17
    // Predicated region
    $region69: #{residual_group_forward.1} parent=5 // pred_check
      %p2682 = pneg %p2681
    $region70: #{residual_group_forward.1} parent=5 // pred_check_branch
      %2684 = sbr.rel (%p2682) target = $region72
    $region71: #{residual_group_forward.1} parent=5 // pred_region
      %s2685 = ssub.s32 %s17, 2
      // Predicated region
      $region73: #{residual_group_forward.1} parent=71 // pred_check
        %p2686 = pneg %p282
      $region74: #{residual_group_forward.1} parent=71 // pred_check_branch
        %2688 = sbr.rel (%p2686) target = $region76
      $region75: #{residual_group_forward.1} parent=71 // pred_region
        %p2689 = scmp.lt.s32.totalorder %s23, 1
        %s2690 = scalar_select %p2689, %s23, 1
        %s2691 = smul.addr %s2690, 4
        %s2692 = smul.addr %s2691, 8
        %s2693 = scalar_lea.vmem %s11, %s2692
      $region76: #{residual_group_forward.1} parent=71 // pred_fallthru
        _
    $region72: #{residual_group_forward.1} parent=5 // pred_fallthru
      _
  $region6: #{residual_group_forward.1} parent=0 // loop_footer
    %s21 = sadd.s32 1, %s17
  $region7: #{residual_group_forward.1} parent=0 // loop_footer_branch
    %16 = sbr.rel target = $region3
  $region8: #{residual_group_forward.1} parent=0 // loop_exit
    _

</llo_original>
